<compile_context>
chip_gen: v6e
topology: v6e:2x2x1
jax: 0.10.0
libtpu: 0.0.40
codegen_flags: <defaults>
</compile_context>

<pallas_src>
import math
from functools import partial

import jax
import jax.numpy as jnp
from jax import lax
from jax.experimental import pallas as pl
from jax.experimental.pallas import tpu as pltpu

EPS = 1e-5  # torch.nn.LayerNorm default


# ------------------------------- kernel ----------------------------------- #

def _layernorm(x, gamma, beta):
    """f32 LayerNorm over the last dim; gamma/beta are (1, D)."""
    mean = jnp.mean(x, axis=-1, keepdims=True)
    var = jnp.mean(jnp.square(x - mean), axis=-1, keepdims=True)
    return (x - mean) * lax.rsqrt(var + EPS) * gamma + beta


def transformer_kernel(x_ref, g1_ref, b1_ref, wqkv_ref, wo_ref, bo_ref,
                       g2_ref, b2_ref, w1_ref, bb1_ref, w2_ref, bb2_ref,
                       ng_ref, nb_ref, o_ref, x_sc, ctx_sc, *, heads, dim_head):
    """Grid = (batch, layer).  One full transformer layer per inner grid step;
    the residual stream stays resident in VMEM (x_sc) across the layer axis."""
    layer = pl.program_id(1)
    bf16 = jnp.bfloat16

    @pl.when(layer == 0)
    def _init():
        x_sc[...] = x_ref[0]                                  # load residual stream once per batch elem

    x = x_sc[...]                                             # (N, D) f32
    n_tok = x.shape[0]
    inner = heads * dim_head
    scale = dim_head ** -0.5

    # ------------------------------ Attention ------------------------------ #
    xn = _layernorm(x, g1_ref[0], b1_ref[0]).astype(bf16)     # (N, D) bf16
    qkv = jnp.dot(xn, wqkv_ref[0],
                  preferred_element_type=jnp.float32)         # (N, 3*inner) f32

    def heads_of(base):
        # (N, inner) slab starting at `base` -> (heads, N, dim_head) bf16
        # (lane-aligned static slices + major-axis stack; no lane reshuffle)
        return jnp.stack(
            [qkv[:, base + h * dim_head: base + (h + 1) * dim_head]
             for h in range(heads)], axis=0).astype(bf16)

    q = heads_of(0)
    k = heads_of(inner)
    v = heads_of(2 * inner)

    # batched QK^T and attn@V over the head axis (single MXU contraction each)
    dots = jnp.einsum('hnd,hmd->hnm', q, k,
                      preferred_element_type=jnp.float32) * scale        # (H, N, N)
    dots = dots - jnp.max(dots, axis=-1, keepdims=True)
    p = jnp.exp(dots)
    attn = p * pl.reciprocal(jnp.sum(p, axis=-1, keepdims=True), approx=True)
    ctx = jnp.einsum('hnm,hmd->hnd', attn.astype(bf16), v,
                     preferred_element_type=jnp.float32)                 # (H, N, dh)

    # 'h n d -> n (h d)': lane-aligned slice-by-slice scratch writes (no concat)
    for h in range(heads):
        ctx_sc[:, h * dim_head:(h + 1) * dim_head] = ctx[h].astype(bf16)

    proj = jnp.dot(ctx_sc[...], wo_ref[0],
                   preferred_element_type=jnp.float32) + bo_ref[0]
    x = x + proj                                              # residual

    # ----------------------------- FeedForward ----------------------------- #
    xn2 = _layernorm(x, g2_ref[0], b2_ref[0]).astype(bf16)
    hid = jnp.dot(xn2, w1_ref[0],
                  preferred_element_type=jnp.float32) + bb1_ref[0]
    # exact (erf) GELU, matching torch.nn.GELU default
    hid = 0.5 * hid * (1.0 + lax.erf(hid * (1.0 / math.sqrt(2.0))))
    y = jnp.dot(hid.astype(bf16), w2_ref[0],
                preferred_element_type=jnp.float32) + bb2_ref[0]
    x = x + y                                                 # residual

    x_sc[...] = x                                             # carry to next layer

    @pl.when(layer == pl.num_programs(1) - 1)
    def _finalize():
        o_ref[0] = _layernorm(x, ng_ref[...], nb_ref[...]).astype(o_ref.dtype)


# ------------------------------ pallas glue -------------------------------- #

def transformer_forward(x, params, *, heads, dim_head):
    B, N, D = x.shape
    depth = params["wqkv"].shape[0]
    inner = heads * dim_head

    def stacked(arr):   # per-layer stacked param: one layer-slice per inner step
        nrest = arr.ndim - 1
        return pl.BlockSpec((1,) + arr.shape[1:],
                            lambda b, l, n=nrest: (l,) + (0,) * n)

    def shared(arr):    # layer-independent param (final LayerNorm)
        return pl.BlockSpec(arr.shape, lambda b, l, n=arr.ndim: (0,) * n)

    x_spec = pl.BlockSpec((1, N, D), lambda b, l: (b, 0, 0))

    layer_args = [params[k] for k in
                  ("ln1_g", "ln1_b", "wqkv", "wo", "bo",
                   "ln2_g", "ln2_b", "w1", "b1", "w2", "b2")]
    final_args = [params["norm_g"], params["norm_b"]]

    in_specs = ([x_spec]
                + [stacked(a) for a in layer_args]
                + [shared(a) for a in final_args])

    kernel = partial(transformer_kernel, heads=heads, dim_head=dim_head)

    return pl.pallas_call(
        kernel,
        out_shape=jax.ShapeDtypeStruct((B, N, D), x.dtype),
        grid_spec=pltpu.PrefetchScalarGridSpec(
            num_scalar_prefetch=0,
            grid=(B, depth),              # layer axis innermost: weights stream, x resident
            in_specs=in_specs,
            out_specs=pl.BlockSpec((1, N, D), lambda b, l: (b, 0, 0)),
            scratch_shapes=[
                pltpu.VMEM((N, D), jnp.float32),        # residual stream (persists over layers)
                pltpu.VMEM((N, inner), jnp.bfloat16),   # attention context 'n (h d)'
            ],
        ),
        compiler_params=pltpu.CompilerParams(
            dimension_semantics=("parallel", "arbitrary"),
            vmem_limit_bytes=32 * 1024 * 1024,
        ),
    )(x, *layer_args, *final_args)


# --------------------------- params & reference ---------------------------- #

def init_params(key, dim, depth, heads, dim_head, mlp_dim):
    inner = heads * dim_head
    k = jax.random.split(key, 12)
    wgt = lambda kk, shape: (jax.random.normal(kk, shape, jnp.float32) * 0.05
                             ).astype(jnp.bfloat16)
    vec = lambda kk, shape, s: jax.random.normal(kk, shape, jnp.float32) * s
    return dict(
        ln1_g=1.0 + vec(k[0], (depth, 1, dim), 0.1),
        ln1_b=vec(k[1], (depth, 1, dim), 0.1),
        wqkv=wgt(k[2], (depth, dim, 3 * inner)),
        wo=wgt(k[3], (depth, inner, dim)),
        bo=vec(k[4], (depth, 1, dim), 0.02),
        ln2_g=1.0 + vec(k[5], (depth, 1, dim), 0.1),
        ln2_b=vec(k[6], (depth, 1, dim), 0.1),
        w1=wgt(k[7], (depth, dim, mlp_dim)),
        b1=vec(k[8], (depth, 1, mlp_dim), 0.02),
        w2=wgt(k[9], (depth, mlp_dim, dim)),
        b2=vec(k[10], (depth, 1, dim), 0.02),
        norm_g=1.0 + vec(k[11], (1, dim), 0.1),
        norm_b=jnp.zeros((1, dim), jnp.float32),
    )


def reference_forward(x, params, *, heads, dim_head):
    """Pure-JAX reference mirroring the PyTorch forward (bf16 matmul operands,
    f32 accumulation — same compute dtype policy as the kernel)."""
    inner = heads * dim_head
    scale = dim_head ** -0.5
    bf = lambda t: t.astype(jnp.bfloat16)

    def ln(t, g, b):
        m = jnp.mean(t, -1, keepdims=True)
        v = jnp.mean(jnp.square(t - m), -1, keepdims=True)
        return (t - m) * lax.rsqrt(v + EPS) * g + b

    depth = params["wqkv"].shape[0]
    B, N, _ = x.shape
    for l in range(depth):
        xn = ln(x, params["ln1_g"][l], params["ln1_b"][l])
        qkv = jnp.dot(bf(xn), params["wqkv"][l], preferred_element_type=jnp.float32)
        q, k, v = jnp.split(qkv, 3, axis=-1)
        r = lambda t: t.reshape(B, N, heads, dim_head).transpose(0, 2, 1, 3)
        q, k, v = r(q), r(k), r(v)
        dots = jnp.einsum("bhnd,bhmd->bhnm", bf(q), bf(k),
                          preferred_element_type=jnp.float32) * scale
        attn = jax.nn.softmax(dots, axis=-1)
        out = jnp.einsum("bhnm,bhmd->bhnd", bf(attn), bf(v),
                         preferred_element_type=jnp.float32)
        out = out.transpose(0, 2, 1, 3).reshape(B, N, inner)
        x = jnp.dot(bf(out), params["wo"][l],
                    preferred_element_type=jnp.float32) + params["bo"][l] + x

        xn = ln(x, params["ln2_g"][l], params["ln2_b"][l])
        h = jnp.dot(bf(xn), params["w1"][l],
                    preferred_element_type=jnp.float32) + params["b1"][l]
        h = 0.5 * h * (1.0 + lax.erf(h / math.sqrt(2.0)))
        x = jnp.dot(bf(h), params["w2"][l],
                    preferred_element_type=jnp.float32) + params["b2"][l] + x
    return ln(x, params["norm_g"], params["norm_b"])


# ----------------------------------- main ---------------------------------- #

if __name__ == "__main__":
    # Small, lane-dense ViT-Transformer config (all last dims multiples of 128)
    B, N = 2, 16                 # batch, tokens
    dim, depth = 128, 2
    heads, dim_head = 2, 128     # inner = 256
    mlp_dim = 256

    key = jax.random.PRNGKey(0)
    kx, kp = jax.random.split(key)
    x = jax.random.normal(kx, (B, N, dim), jnp.float32)
    params = init_params(kp, dim, depth, heads, dim_head, mlp_dim)

    fwd = jax.jit(partial(transformer_forward, heads=heads, dim_head=dim_head))
    out = jax.block_until_ready(fwd(x, params))

    ref = reference_forward(x, params, heads=heads, dim_head=dim_head)
    assert out.shape == (B, N, dim)
    err = float(jnp.max(jnp.abs(out - ref)))
    assert jnp.allclose(out, ref, atol=2e-2, rtol=2e-2), f"max abs err {err}"

    print("KERNEL_OK")
</pallas_src>

<mosaic_0001>
module attributes {stable_mosaic.version = 11 : i64} {
  func.func @transformer_kernel(%arg0: i32, %arg1: i32, %arg2: memref<1x16x128xf32, #tpu.memory_space<vmem>>, %arg3: memref<1x1x128xf32, #tpu.memory_space<vmem>>, %arg4: memref<1x1x128xf32, #tpu.memory_space<vmem>>, %arg5: memref<1x128x768xbf16, #tpu.memory_space<vmem>>, %arg6: memref<1x256x128xbf16, #tpu.memory_space<vmem>>, %arg7: memref<1x1x128xf32, #tpu.memory_space<vmem>>, %arg8: memref<1x1x128xf32, #tpu.memory_space<vmem>>, %arg9: memref<1x1x128xf32, #tpu.memory_space<vmem>>, %arg10: memref<1x128x256xbf16, #tpu.memory_space<vmem>>, %arg11: memref<1x1x256xf32, #tpu.memory_space<vmem>>, %arg12: memref<1x256x128xbf16, #tpu.memory_space<vmem>>, %arg13: memref<1x1x128xf32, #tpu.memory_space<vmem>>, %arg14: memref<1x128xf32, #tpu.memory_space<vmem>>, %arg15: memref<1x128xf32, #tpu.memory_space<vmem>>, %arg16: memref<1x16x128xf32, #tpu.memory_space<vmem>>, %arg17: memref<16x128xf32, #tpu.memory_space<vmem>>, %arg18: memref<16x256xbf16, #tpu.memory_space<vmem>>) attributes {dimension_semantics = [#tpu.dimension_semantics<parallel>, #tpu.dimension_semantics<arbitrary>], iteration_bounds = array<i64: 2, 2>, scalar_prefetch = 0 : i64, scratch_operands = 2 : i64, tpu.core_type = #tpu.core_type<tc>, window_params = [{transform_indices = @transform_0, window_bounds = array<i64: 1, 16, 128>}, {transform_indices = @transform_1, window_bounds = array<i64: 1, 1, 128>}, {transform_indices = @transform_2, window_bounds = array<i64: 1, 1, 128>}, {transform_indices = @transform_3, window_bounds = array<i64: 1, 128, 768>}, {transform_indices = @transform_4, window_bounds = array<i64: 1, 256, 128>}, {transform_indices = @transform_5, window_bounds = array<i64: 1, 1, 128>}, {transform_indices = @transform_6, window_bounds = array<i64: 1, 1, 128>}, {transform_indices = @transform_7, window_bounds = array<i64: 1, 1, 128>}, {transform_indices = @transform_8, window_bounds = array<i64: 1, 128, 256>}, {transform_indices = @transform_9, window_bounds = array<i64: 1, 1, 256>}, {transform_indices = @transform_10, window_bounds = array<i64: 1, 256, 128>}, {transform_indices = @transform_11, window_bounds = array<i64: 1, 1, 128>}, {pipeline_mode = #tpu.pipeline_mode<synchronous>, transform_indices = @transform_12, window_bounds = array<i64: 1, 128>}, {pipeline_mode = #tpu.pipeline_mode<synchronous>, transform_indices = @transform_13, window_bounds = array<i64: 1, 128>}, {transform_indices = @transform_14, window_bounds = array<i64: 1, 16, 128>}]} {
    %c0_i32 = arith.constant 0 : i32
    %0 = arith.cmpi eq, %arg1, %c0_i32 : i32
    %1 = arith.extui %0 : i1 to i32
    %c0_i32_0 = arith.constant 0 : i32
    %2 = arith.cmpi ne, %1, %c0_i32_0 : i32
    scf.if %2 {
      %c0_64 = arith.constant 0 : index
      %c0_65 = arith.constant 0 : index
      %c0_66 = arith.constant 0 : index
      %139 = vector.load %arg2[%c0_64, %c0_65, %c0_66] : memref<1x16x128xf32, #tpu.memory_space<vmem>>, vector<1x16x128xf32>
      %140 = vector.shape_cast %139 : vector<1x16x128xf32> to vector<16x128xf32>
      %c0_67 = arith.constant 0 : index
      %c0_68 = arith.constant 0 : index
      %141 = vector.load %arg17[%c0_67, %c0_68] : memref<16x128xf32, #tpu.memory_space<vmem>>, vector<16x128xf32>
      tpu.vector_store %arg17[%c0_67, %c0_68], %140 {strides = array<i32>} : memref<16x128xf32, #tpu.memory_space<vmem>>, vector<16x128xf32>,
    } else {
    }
    %c0 = arith.constant 0 : index
    %c0_1 = arith.constant 0 : index
    %3 = vector.load %arg17[%c0, %c0_1] : memref<16x128xf32, #tpu.memory_space<vmem>>, vector<16x128xf32>
    %c0_2 = arith.constant 0 : index
    %c0_3 = arith.constant 0 : index
    %c0_4 = arith.constant 0 : index
    %4 = vector.load %arg3[%c0_2, %c0_3, %c0_4] : memref<1x1x128xf32, #tpu.memory_space<vmem>>, vector<1x1x128xf32>
    %5 = vector.shape_cast %4 : vector<1x1x128xf32> to vector<1x128xf32>
    %c0_5 = arith.constant 0 : index
    %c0_6 = arith.constant 0 : index
    %c0_7 = arith.constant 0 : index
    %6 = vector.load %arg4[%c0_5, %c0_6, %c0_7] : memref<1x1x128xf32, #tpu.memory_space<vmem>>, vector<1x1x128xf32>
    %7 = vector.shape_cast %6 : vector<1x1x128xf32> to vector<1x128xf32>
    %cst = arith.constant dense<0.000000e+00> : vector<16xf32>
    %8 = vector.multi_reduction <add>, %3, %cst [1] : vector<16x128xf32> to vector<16xf32>
    %9 = vector.shape_cast %8 : vector<16xf32> to vector<16x1xf32>
    %cst_8 = arith.constant 1.280000e+02 : f32
    %10 = vector.broadcast %cst_8 : f32 to vector<16x1xf32>
    %11 = arith.divf %9, %10 : vector<16x1xf32>
    %12 = vector.broadcast %11 : vector<16x1xf32> to vector<16x128xf32>
    %13 = arith.subf %3, %12 : vector<16x128xf32>
    %14 = arith.mulf %13, %13 : vector<16x128xf32>
    %cst_9 = arith.constant dense<0.000000e+00> : vector<16xf32>
    %15 = vector.multi_reduction <add>, %14, %cst_9 [1] : vector<16x128xf32> to vector<16xf32>
    %16 = vector.shape_cast %15 : vector<16xf32> to vector<16x1xf32>
    %cst_10 = arith.constant 1.280000e+02 : f32
    %17 = vector.broadcast %cst_10 : f32 to vector<16x1xf32>
    %18 = arith.divf %16, %17 : vector<16x1xf32>
    %19 = vector.broadcast %11 : vector<16x1xf32> to vector<16x128xf32>
    %20 = arith.subf %3, %19 : vector<16x128xf32>
    %cst_11 = arith.constant 9.99999974E-6 : f32
    %21 = vector.broadcast %cst_11 : f32 to vector<16x1xf32>
    %22 = arith.addf %18, %21 : vector<16x1xf32>
    %23 = math.rsqrt %22 : vector<16x1xf32>
    %24 = vector.broadcast %23 : vector<16x1xf32> to vector<16x128xf32>
    %25 = arith.mulf %20, %24 : vector<16x128xf32>
    %26 = vector.broadcast %5 : vector<1x128xf32> to vector<16x128xf32>
    %27 = arith.mulf %25, %26 : vector<16x128xf32>
    %28 = vector.broadcast %7 : vector<1x128xf32> to vector<16x128xf32>
    %29 = arith.addf %27, %28 : vector<16x128xf32>
    %30 = arith.truncf %29 : vector<16x128xf32> to vector<16x128xbf16>
    %c0_12 = arith.constant 0 : index
    %c0_13 = arith.constant 0 : index
    %c0_14 = arith.constant 0 : index
    %31 = vector.load %arg5[%c0_12, %c0_13, %c0_14] : memref<1x128x768xbf16, #tpu.memory_space<vmem>>, vector<1x128x768xbf16>
    %32 = vector.shape_cast %31 : vector<1x128x768xbf16> to vector<128x768xbf16>
    %cst_15 = arith.constant dense<0.000000e+00> : vector<16x768xf32>
    %33 = tpu.matmul %30, %32, %cst_15 {dimension_numbers = #tpu.dot_dimension_numbers<[1], [0], [0], [1], [0, 0, 1, 1], [], []>} : vector<16x128xbf16>, vector<128x768xbf16>, vector<16x768xf32> -> vector<16x768xf32>
    %34 = vector.extract_strided_slice %33 {offsets = [0, 0], sizes = [16, 128], strides = [1, 1]} : vector<16x768xf32> to vector<16x128xf32>
    %35 = vector.extract_strided_slice %33 {offsets = [0, 128], sizes = [16, 128], strides = [1, 1]} : vector<16x768xf32> to vector<16x128xf32>
    %36 = vector.shape_cast %34 : vector<16x128xf32> to vector<1x16x128xf32>
    %37 = vector.shape_cast %35 : vector<16x128xf32> to vector<1x16x128xf32>
    %38 = tpu.concatenate %36, %37 in 0 : vector<1x16x128xf32>, vector<1x16x128xf32> -> vector<2x16x128xf32>
    %39 = arith.truncf %38 : vector<2x16x128xf32> to vector<2x16x128xbf16>
    %40 = vector.extract_strided_slice %33 {offsets = [0, 256], sizes = [16, 128], strides = [1, 1]} : vector<16x768xf32> to vector<16x128xf32>
    %41 = vector.extract_strided_slice %33 {offsets = [0, 384], sizes = [16, 128], strides = [1, 1]} : vector<16x768xf32> to vector<16x128xf32>
    %42 = vector.shape_cast %40 : vector<16x128xf32> to vector<1x16x128xf32>
    %43 = vector.shape_cast %41 : vector<16x128xf32> to vector<1x16x128xf32>
    %44 = tpu.concatenate %42, %43 in 0 : vector<1x16x128xf32>, vector<1x16x128xf32> -> vector<2x16x128xf32>
    %45 = arith.truncf %44 : vector<2x16x128xf32> to vector<2x16x128xbf16>
    %46 = vector.extract_strided_slice %33 {offsets = [0, 512], sizes = [16, 128], strides = [1, 1]} : vector<16x768xf32> to vector<16x128xf32>
    %47 = vector.extract_strided_slice %33 {offsets = [0, 640], sizes = [16, 128], strides = [1, 1]} : vector<16x768xf32> to vector<16x128xf32>
    %48 = vector.shape_cast %46 : vector<16x128xf32> to vector<1x16x128xf32>
    %49 = vector.shape_cast %47 : vector<16x128xf32> to vector<1x16x128xf32>
    %50 = tpu.concatenate %48, %49 in 0 : vector<1x16x128xf32>, vector<1x16x128xf32> -> vector<2x16x128xf32>
    %51 = arith.truncf %50 : vector<2x16x128xf32> to vector<2x16x128xbf16>
    "tpu.trace_start"() <{level = 10 : i32, message = "hnd,hmd->hnm"}> : () -> ()
    %cst_16 = arith.constant dense<0.000000e+00> : vector<2x16x16xf32>
    %52 = tpu.matmul %39, %45, %cst_16 {dimension_numbers = #tpu.dot_dimension_numbers<[2], [2], [1], [1], [0, 0, 0, 1, 1, 1], [0], [0]>} : vector<2x16x128xbf16>, vector<2x16x128xbf16>, vector<2x16x16xf32> -> vector<2x16x16xf32>
    "tpu.trace_stop"() : () -> ()
    %cst_17 = arith.constant 0.0883883461 : f32
    %53 = vector.broadcast %cst_17 : f32 to vector<2x16x16xf32>
    %54 = arith.mulf %52, %53 : vector<2x16x16xf32>
    %cst_18 = arith.constant dense<0xFF800000> : vector<2x16xf32>
    %55 = vector.multi_reduction <maximumf>, %54, %cst_18 [2] : vector<2x16x16xf32> to vector<2x16xf32>
    %56 = vector.shape_cast %55 : vector<2x16xf32> to vector<2x16x1xf32>
    %57 = vector.broadcast %56 : vector<2x16x1xf32> to vector<2x16x16xf32>
    %58 = arith.subf %54, %57 : vector<2x16x16xf32>
    %59 = math.exp %58 : vector<2x16x16xf32>
    %cst_19 = arith.constant dense<0.000000e+00> : vector<2x16xf32>
    %60 = vector.multi_reduction <add>, %59, %cst_19 [2] : vector<2x16x16xf32> to vector<2x16xf32>
    %61 = vector.shape_cast %60 : vector<2x16xf32> to vector<2x16x1xf32>
    %62 = tpu.reciprocal %61 {approx = true} : vector<2x16x1xf32> -> vector<2x16x1xf32>
    %63 = vector.broadcast %62 : vector<2x16x1xf32> to vector<2x16x16xf32>
    %64 = arith.mulf %59, %63 : vector<2x16x16xf32>
    %65 = arith.truncf %64 : vector<2x16x16xf32> to vector<2x16x16xbf16>
    "tpu.trace_start"() <{level = 10 : i32, message = "hnm,hmd->hnd"}> : () -> ()
    %cst_20 = arith.constant dense<0.000000e+00> : vector<2x16x128xf32>
    %66 = tpu.matmul %65, %51, %cst_20 {dimension_numbers = #tpu.dot_dimension_numbers<[2], [1], [1], [2], [0, 0, 0, 1, 1, 2], [0], [0]>} : vector<2x16x16xbf16>, vector<2x16x128xbf16>, vector<2x16x128xf32> -> vector<2x16x128xf32>
    "tpu.trace_stop"() : () -> ()
    %67 = vector.extract_strided_slice %66 {offsets = [0, 0, 0], sizes = [1, 16, 128], strides = [1, 1, 1]} : vector<2x16x128xf32> to vector<1x16x128xf32>
    %68 = vector.shape_cast %67 : vector<1x16x128xf32> to vector<16x128xf32>
    %69 = arith.truncf %68 : vector<16x128xf32> to vector<16x128xbf16>
    %c0_21 = arith.constant 0 : index
    %c0_22 = arith.constant 0 : index
    %70 = vector.load %arg18[%c0_21, %c0_22] : memref<16x256xbf16, #tpu.memory_space<vmem>>, vector<16x128xbf16>
    tpu.vector_store %arg18[%c0_21, %c0_22], %69 {strides = array<i32>} : memref<16x256xbf16, #tpu.memory_space<vmem>>, vector<16x128xbf16>,
    %71 = vector.extract_strided_slice %66 {offsets = [1, 0, 0], sizes = [1, 16, 128], strides = [1, 1, 1]} : vector<2x16x128xf32> to vector<1x16x128xf32>
    %72 = vector.shape_cast %71 : vector<1x16x128xf32> to vector<16x128xf32>
    %73 = arith.truncf %72 : vector<16x128xf32> to vector<16x128xbf16>
    %c0_23 = arith.constant 0 : index
    %c128 = arith.constant 128 : index
    %74 = vector.load %arg18[%c0_23, %c128] : memref<16x256xbf16, #tpu.memory_space<vmem>>, vector<16x128xbf16>
    tpu.vector_store %arg18[%c0_23, %c128], %73 {strides = array<i32>} : memref<16x256xbf16, #tpu.memory_space<vmem>>, vector<16x128xbf16>,
    %c0_24 = arith.constant 0 : index
    %c0_25 = arith.constant 0 : index
    %75 = vector.load %arg18[%c0_24, %c0_25] : memref<16x256xbf16, #tpu.memory_space<vmem>>, vector<16x256xbf16>
    %c0_26 = arith.constant 0 : index
    %c0_27 = arith.constant 0 : index
    %c0_28 = arith.constant 0 : index
    %76 = vector.load %arg6[%c0_26, %c0_27, %c0_28] : memref<1x256x128xbf16, #tpu.memory_space<vmem>>, vector<1x256x128xbf16>
    %77 = vector.shape_cast %76 : vector<1x256x128xbf16> to vector<256x128xbf16>
    %cst_29 = arith.constant dense<0.000000e+00> : vector<16x128xf32>
    %78 = tpu.matmul %75, %77, %cst_29 {dimension_numbers = #tpu.dot_dimension_numbers<[1], [0], [0], [1], [0, 0, 1, 1], [], []>} : vector<16x256xbf16>, vector<256x128xbf16>, vector<16x128xf32> -> vector<16x128xf32>
    %c0_30 = arith.constant 0 : index
    %c0_31 = arith.constant 0 : index
    %c0_32 = arith.constant 0 : index
    %79 = vector.load %arg7[%c0_30, %c0_31, %c0_32] : memref<1x1x128xf32, #tpu.memory_space<vmem>>, vector<1x1x128xf32>
    %80 = vector.shape_cast %79 : vector<1x1x128xf32> to vector<1x128xf32>
    %81 = vector.broadcast %80 : vector<1x128xf32> to vector<16x128xf32>
    %82 = arith.addf %78, %81 : vector<16x128xf32>
    %83 = arith.addf %3, %82 : vector<16x128xf32>
    %c0_33 = arith.constant 0 : index
    %c0_34 = arith.constant 0 : index
    %c0_35 = arith.constant 0 : index
    %84 = vector.load %arg8[%c0_33, %c0_34, %c0_35] : memref<1x1x128xf32, #tpu.memory_space<vmem>>, vector<1x1x128xf32>
    %85 = vector.shape_cast %84 : vector<1x1x128xf32> to vector<1x128xf32>
    %c0_36 = arith.constant 0 : index
    %c0_37 = arith.constant 0 : index
    %c0_38 = arith.constant 0 : index
    %86 = vector.load %arg9[%c0_36, %c0_37, %c0_38] : memref<1x1x128xf32, #tpu.memory_space<vmem>>, vector<1x1x128xf32>
    %87 = vector.shape_cast %86 : vector<1x1x128xf32> to vector<1x128xf32>
    %cst_39 = arith.constant dense<0.000000e+00> : vector<16xf32>
    %88 = vector.multi_reduction <add>, %83, %cst_39 [1] : vector<16x128xf32> to vector<16xf32>
    %89 = vector.shape_cast %88 : vector<16xf32> to vector<16x1xf32>
    %cst_40 = arith.constant 1.280000e+02 : f32
    %90 = vector.broadcast %cst_40 : f32 to vector<16x1xf32>
    %91 = arith.divf %89, %90 : vector<16x1xf32>
    %92 = vector.broadcast %91 : vector<16x1xf32> to vector<16x128xf32>
    %93 = arith.subf %83, %92 : vector<16x128xf32>
    %94 = arith.mulf %93, %93 : vector<16x128xf32>
    %cst_41 = arith.constant dense<0.000000e+00> : vector<16xf32>
    %95 = vector.multi_reduction <add>, %94, %cst_41 [1] : vector<16x128xf32> to vector<16xf32>
    %96 = vector.shape_cast %95 : vector<16xf32> to vector<16x1xf32>
    %cst_42 = arith.constant 1.280000e+02 : f32
    %97 = vector.broadcast %cst_42 : f32 to vector<16x1xf32>
    %98 = arith.divf %96, %97 : vector<16x1xf32>
    %99 = vector.broadcast %91 : vector<16x1xf32> to vector<16x128xf32>
    %100 = arith.subf %83, %99 : vector<16x128xf32>
    %cst_43 = arith.constant 9.99999974E-6 : f32
    %101 = vector.broadcast %cst_43 : f32 to vector<16x1xf32>
    %102 = arith.addf %98, %101 : vector<16x1xf32>
    %103 = math.rsqrt %102 : vector<16x1xf32>
    %104 = vector.broadcast %103 : vector<16x1xf32> to vector<16x128xf32>
    %105 = arith.mulf %100, %104 : vector<16x128xf32>
    %106 = vector.broadcast %85 : vector<1x128xf32> to vector<16x128xf32>
    %107 = arith.mulf %105, %106 : vector<16x128xf32>
    %108 = vector.broadcast %87 : vector<1x128xf32> to vector<16x128xf32>
    %109 = arith.addf %107, %108 : vector<16x128xf32>
    %110 = arith.truncf %109 : vector<16x128xf32> to vector<16x128xbf16>
    %c0_44 = arith.constant 0 : index
    %c0_45 = arith.constant 0 : index
    %c0_46 = arith.constant 0 : index
    %111 = vector.load %arg10[%c0_44, %c0_45, %c0_46] : memref<1x128x256xbf16, #tpu.memory_space<vmem>>, vector<1x128x256xbf16>
    %112 = vector.shape_cast %111 : vector<1x128x256xbf16> to vector<128x256xbf16>
    %cst_47 = arith.constant dense<0.000000e+00> : vector<16x256xf32>
    %113 = tpu.matmul %110, %112, %cst_47 {dimension_numbers = #tpu.dot_dimension_numbers<[1], [0], [0], [1], [0, 0, 1, 1], [], []>} : vector<16x128xbf16>, vector<128x256xbf16>, vector<16x256xf32> -> vector<16x256xf32>
    %c0_48 = arith.constant 0 : index
    %c0_49 = arith.constant 0 : index
    %c0_50 = arith.constant 0 : index
    %114 = vector.load %arg11[%c0_48, %c0_49, %c0_50] : memref<1x1x256xf32, #tpu.memory_space<vmem>>, vector<1x1x256xf32>
    %115 = vector.shape_cast %114 : vector<1x1x256xf32> to vector<1x256xf32>
    %116 = vector.broadcast %115 : vector<1x256xf32> to vector<16x256xf32>
    %117 = arith.addf %113, %116 : vector<16x256xf32>
    %cst_51 = arith.constant 5.000000e-01 : f32
    %118 = vector.broadcast %cst_51 : f32 to vector<16x256xf32>
    %119 = arith.mulf %118, %117 : vector<16x256xf32>
    %cst_52 = arith.constant 0.707106769 : f32
    %120 = vector.broadcast %cst_52 : f32 to vector<16x256xf32>
    %121 = arith.mulf %117, %120 : vector<16x256xf32>
    %122 = math.erf %121 : vector<16x256xf32>
    %cst_53 = arith.constant 1.000000e+00 : f32
    %123 = vector.broadcast %cst_53 : f32 to vector<16x256xf32>
    %124 = arith.addf %123, %122 : vector<16x256xf32>
    %125 = arith.mulf %119, %124 : vector<16x256xf32>
    %126 = arith.truncf %125 : vector<16x256xf32> to vector<16x256xbf16>
    %c0_54 = arith.constant 0 : index
    %c0_55 = arith.constant 0 : index
    %c0_56 = arith.constant 0 : index
    %127 = vector.load %arg12[%c0_54, %c0_55, %c0_56] : memref<1x256x128xbf16, #tpu.memory_space<vmem>>, vector<1x256x128xbf16>
    %128 = vector.shape_cast %127 : vector<1x256x128xbf16> to vector<256x128xbf16>
    %cst_57 = arith.constant dense<0.000000e+00> : vector<16x128xf32>
    %129 = tpu.matmul %126, %128, %cst_57 {dimension_numbers = #tpu.dot_dimension_numbers<[1], [0], [0], [1], [0, 0, 1, 1], [], []>} : vector<16x256xbf16>, vector<256x128xbf16>, vector<16x128xf32> -> vector<16x128xf32>
    %c0_58 = arith.constant 0 : index
    %c0_59 = arith.constant 0 : index
    %c0_60 = arith.constant 0 : index
    %130 = vector.load %arg13[%c0_58, %c0_59, %c0_60] : memref<1x1x128xf32, #tpu.memory_space<vmem>>, vector<1x1x128xf32>
    %131 = vector.shape_cast %130 : vector<1x1x128xf32> to vector<1x128xf32>
    %132 = vector.broadcast %131 : vector<1x128xf32> to vector<16x128xf32>
    %133 = arith.addf %129, %132 : vector<16x128xf32>
    %134 = arith.addf %83, %133 : vector<16x128xf32>
    %c0_61 = arith.constant 0 : index
    %c0_62 = arith.constant 0 : index
    %135 = vector.load %arg17[%c0_61, %c0_62] : memref<16x128xf32, #tpu.memory_space<vmem>>, vector<16x128xf32>
    tpu.vector_store %arg17[%c0_61, %c0_62], %134 {strides = array<i32>} : memref<16x128xf32, #tpu.memory_space<vmem>>, vector<16x128xf32>,
    %c1_i32 = arith.constant 1 : i32
    %136 = arith.cmpi eq, %arg1, %c1_i32 : i32
    %137 = arith.extui %136 : i1 to i32
    %c0_i32_63 = arith.constant 0 : i32
    %138 = arith.cmpi ne, %137, %c0_i32_63 : i32
    scf.if %138 {
      %c0_64 = arith.constant 0 : index
      %c0_65 = arith.constant 0 : index
      %139 = vector.load %arg14[%c0_64, %c0_65] : memref<1x128xf32, #tpu.memory_space<vmem>>, vector<1x128xf32>
      %c0_66 = arith.constant 0 : index
      %c0_67 = arith.constant 0 : index
      %140 = vector.load %arg15[%c0_66, %c0_67] : memref<1x128xf32, #tpu.memory_space<vmem>>, vector<1x128xf32>
      %cst_68 = arith.constant dense<0.000000e+00> : vector<16xf32>
      %141 = vector.multi_reduction <add>, %134, %cst_68 [1] : vector<16x128xf32> to vector<16xf32>
      %142 = vector.shape_cast %141 : vector<16xf32> to vector<16x1xf32>
      %cst_69 = arith.constant 1.280000e+02 : f32
      %143 = vector.broadcast %cst_69 : f32 to vector<16x1xf32>
      %144 = arith.divf %142, %143 : vector<16x1xf32>
      %145 = vector.broadcast %144 : vector<16x1xf32> to vector<16x128xf32>
      %146 = arith.subf %134, %145 : vector<16x128xf32>
      %147 = arith.mulf %146, %146 : vector<16x128xf32>
      %cst_70 = arith.constant dense<0.000000e+00> : vector<16xf32>
      %148 = vector.multi_reduction <add>, %147, %cst_70 [1] : vector<16x128xf32> to vector<16xf32>
      %149 = vector.shape_cast %148 : vector<16xf32> to vector<16x1xf32>
      %cst_71 = arith.constant 1.280000e+02 : f32
      %150 = vector.broadcast %cst_71 : f32 to vector<16x1xf32>
      %151 = arith.divf %149, %150 : vector<16x1xf32>
      %152 = vector.broadcast %144 : vector<16x1xf32> to vector<16x128xf32>
      %153 = arith.subf %134, %152 : vector<16x128xf32>
      %cst_72 = arith.constant 9.99999974E-6 : f32
      %154 = vector.broadcast %cst_72 : f32 to vector<16x1xf32>
      %155 = arith.addf %151, %154 : vector<16x1xf32>
      %156 = math.rsqrt %155 : vector<16x1xf32>
      %157 = vector.broadcast %156 : vector<16x1xf32> to vector<16x128xf32>
      %158 = arith.mulf %153, %157 : vector<16x128xf32>
      %159 = vector.broadcast %139 : vector<1x128xf32> to vector<16x128xf32>
      %160 = arith.mulf %158, %159 : vector<16x128xf32>
      %161 = vector.broadcast %140 : vector<1x128xf32> to vector<16x128xf32>
      %162 = arith.addf %160, %161 : vector<16x128xf32>
      %c0_73 = arith.constant 0 : index
      %c0_74 = arith.constant 0 : index
      %c0_75 = arith.constant 0 : index
      %163 = vector.load %arg16[%c0_73, %c0_74, %c0_75] : memref<1x16x128xf32, #tpu.memory_space<vmem>>, vector<1x16x128xf32>
      %164 = vector.shape_cast %163 : vector<1x16x128xf32> to vector<16x128xf32>
      %165 = vector.shape_cast %162 : vector<16x128xf32> to vector<1x16x128xf32>
      tpu.vector_store %arg16[%c0_73, %c0_74, %c0_75], %165 {strides = array<i32>} : memref<1x16x128xf32, #tpu.memory_space<vmem>>, vector<1x16x128xf32>,
    } else {
    }
    return
  }
  func.func @transform_0(%arg0: i32, %arg1: i32) -> (i32, i32, i32) {
    %c0_i32 = arith.constant 0 : i32
    %c0_i32_0 = arith.constant 0 : i32
    %c0_i32_1 = arith.constant 0 : i32
    return %arg0, %c0_i32, %c0_i32_0 : i32, i32, i32
  }
  func.func @transform_1(%arg0: i32, %arg1: i32) -> (i32, i32, i32) {
    %c0_i32 = arith.constant 0 : i32
    %c0_i32_0 = arith.constant 0 : i32
    %c0_i32_1 = arith.constant 0 : i32
    return %arg1, %c0_i32, %c0_i32_0 : i32, i32, i32
  }
  func.func @transform_2(%arg0: i32, %arg1: i32) -> (i32, i32, i32) {
    %c0_i32 = arith.constant 0 : i32
    %c0_i32_0 = arith.constant 0 : i32
    %c0_i32_1 = arith.constant 0 : i32
    return %arg1, %c0_i32, %c0_i32_0 : i32, i32, i32
  }
  func.func @transform_3(%arg0: i32, %arg1: i32) -> (i32, i32, i32) {
    %c0_i32 = arith.constant 0 : i32
    %c0_i32_0 = arith.constant 0 : i32
    %c0_i32_1 = arith.constant 0 : i32
    return %arg1, %c0_i32, %c0_i32_0 : i32, i32, i32
  }
  func.func @transform_4(%arg0: i32, %arg1: i32) -> (i32, i32, i32) {
    %c0_i32 = arith.constant 0 : i32
    %c0_i32_0 = arith.constant 0 : i32
    %c0_i32_1 = arith.constant 0 : i32
    return %arg1, %c0_i32, %c0_i32_0 : i32, i32, i32
  }
  func.func @transform_5(%arg0: i32, %arg1: i32) -> (i32, i32, i32) {
    %c0_i32 = arith.constant 0 : i32
    %c0_i32_0 = arith.constant 0 : i32
    %c0_i32_1 = arith.constant 0 : i32
    return %arg1, %c0_i32, %c0_i32_0 : i32, i32, i32
  }
  func.func @transform_6(%arg0: i32, %arg1: i32) -> (i32, i32, i32) {
    %c0_i32 = arith.constant 0 : i32
    %c0_i32_0 = arith.constant 0 : i32
    %c0_i32_1 = arith.constant 0 : i32
    return %arg1, %c0_i32, %c0_i32_0 : i32, i32, i32
  }
  func.func @transform_7(%arg0: i32, %arg1: i32) -> (i32, i32, i32) {
    %c0_i32 = arith.constant 0 : i32
    %c0_i32_0 = arith.constant 0 : i32
    %c0_i32_1 = arith.constant 0 : i32
    return %arg1, %c0_i32, %c0_i32_0 : i32, i32, i32
  }
  func.func @transform_8(%arg0: i32, %arg1: i32) -> (i32, i32, i32) {
    %c0_i32 = arith.constant 0 : i32
    %c0_i32_0 = arith.constant 0 : i32
    %c0_i32_1 = arith.constant 0 : i32
    return %arg1, %c0_i32, %c0_i32_0 : i32, i32, i32
  }
  func.func @transform_9(%arg0: i32, %arg1: i32) -> (i32, i32, i32) {
    %c0_i32 = arith.constant 0 : i32
    %c0_i32_0 = arith.constant 0 : i32
    %c0_i32_1 = arith.constant 0 : i32
    return %arg1, %c0_i32, %c0_i32_0 : i32, i32, i32
  }
  func.func @transform_10(%arg0: i32, %arg1: i32) -> (i32, i32, i32) {
    %c0_i32 = arith.constant 0 : i32
    %c0_i32_0 = arith.constant 0 : i32
    %c0_i32_1 = arith.constant 0 : i32
    return %arg1, %c0_i32, %c0_i32_0 : i32, i32, i32
  }
  func.func @transform_11(%arg0: i32, %arg1: i32) -> (i32, i32, i32) {
    %c0_i32 = arith.constant 0 : i32
    %c0_i32_0 = arith.constant 0 : i32
    %c0_i32_1 = arith.constant 0 : i32
    return %arg1, %c0_i32, %c0_i32_0 : i32, i32, i32
  }
  func.func @transform_12(%arg0: i32, %arg1: i32) -> (i32, i32) {
    %c0_i32 = arith.constant 0 : i32
    %c0_i32_0 = arith.constant 0 : i32
    %c0_i32_1 = arith.constant 0 : i32
    return %c0_i32, %c0_i32_0 : i32, i32
  }
  func.func @transform_13(%arg0: i32, %arg1: i32) -> (i32, i32) {
    %c0_i32 = arith.constant 0 : i32
    %c0_i32_0 = arith.constant 0 : i32
    %c0_i32_1 = arith.constant 0 : i32
    return %c0_i32, %c0_i32_0 : i32, i32
  }
  func.func @transform_14(%arg0: i32, %arg1: i32) -> (i32, i32, i32) {
    %c0_i32 = arith.constant 0 : i32
    %c0_i32_0 = arith.constant 0 : i32
    %c0_i32_1 = arith.constant 0 : i32
    return %arg0, %c0_i32, %c0_i32_0 : i32, i32, i32
  }
}

</mosaic_0001>

<llo_original>
// kernel: transformer_forward.1
$region0: #{transformer_forward.1}
  #allocation0 [shape = 'u32[]', space=smem, size = 0x4, offset = 0x4, fixed_abs, tag = 'smem constant byte address 0x4 - core index']
  #allocation1 [shape = 'u32[144,128]{1,0:T(1,128)}', space=vmem, size = 0x12000, scoped, tag = 'internal scratch']
  #allocation2 [shape = 'f32[16,128]{1,0:T(8,128)}', space=vmem, size = 0x2000, scoped, tag = 'scratch operand']
  #allocation3 [shape = 'bf16[16,256]{1,0:T(8,128)(2,1)}', space=vmem, size = 0x2000, scoped, tag = 'scratch operand']
  %s0 = inlined_call_operand.hbm [shape: f32[2,16,128], index: 0, kind: input, shape index: {}]
  %s1 = inlined_call_operand.vmem [shape: f32[2,1,128], index: 1, kind: input, shape index: {}]
  %s2 = inlined_call_operand.vmem [shape: f32[2,1,128], index: 2, kind: input, shape index: {}]
  %s3 = inlined_call_operand.hbm [shape: bf16[2,128,768], index: 3, kind: input, shape index: {}]
  %s4 = inlined_call_operand.hbm [shape: bf16[2,256,128], index: 4, kind: input, shape index: {}]
  %s5 = inlined_call_operand.hbm [shape: f32[2,1,128], index: 5, kind: input, shape index: {}]
  %s6 = inlined_call_operand.vmem [shape: f32[2,1,128], index: 6, kind: input, shape index: {}]
  %s7 = inlined_call_operand.vmem [shape: f32[2,1,128], index: 7, kind: input, shape index: {}]
  %s8 = inlined_call_operand.hbm [shape: bf16[2,128,256], index: 8, kind: input, shape index: {}]
  %s9 = inlined_call_operand.hbm [shape: f32[2,1,256], index: 9, kind: input, shape index: {}]
  %s10 = inlined_call_operand.hbm [shape: bf16[2,256,128], index: 10, kind: input, shape index: {}]
  %s11 = inlined_call_operand.hbm [shape: f32[2,1,128], index: 11, kind: input, shape index: {}]
  %s12 = inlined_call_operand.vmem [shape: f32[1,128], index: 12, kind: input, shape index: {}]
  %s13 = inlined_call_operand.vmem [shape: f32[1,128], index: 13, kind: input, shape index: {}]
  %s14 = inlined_call_operand.hbm [shape: f32[2,16,128], index: 14, kind: output, shape index: {}]
  %s15 = sld [smem:[#allocation0]]
  $region129: #{transformer_forward.1} parent=0
    _
  %s17 = ssub.s32 1, %s15
  %s18 = scalar_select 0, %s17, %s15
  $region1: #{transformer_forward.1} parent=0
    #allocation4 [shape = 'u8[16384]{0}', space=vmem, size = 0x4000, scoped, tag = 'input window, operand 0']
    #allocation5 [shape = 's32[2]{0}', space=sflag, size = 0x8, scoped, tag = 'scoped memory for transformer_forward.1']
    #allocation6 [shape = 's32[2]{0}', space=sflag, size = 0x8, scoped, tag = 'scoped memory for transformer_forward.1']
    #allocation7 [shape = 'u8[393216]{0}', space=vmem, size = 0x60000, scoped, tag = 'input window, operand 3']
    #allocation8 [shape = 's32[2]{0}', space=sflag, size = 0x8, scoped, tag = 'scoped memory for transformer_forward.1']
    #allocation9 [shape = 'u8[131072]{0}', space=vmem, size = 0x20000, scoped, tag = 'input window, operand 4']
    #allocation10 [shape = 'u8[1024]{0}', space=vmem, size = 0x400, scoped, tag = 'input window, operand 5']
    #allocation11 [shape = 's32[2]{0}', space=sflag, size = 0x8, scoped, tag = 'scoped memory for transformer_forward.1']
    #allocation12 [shape = 'u8[131072]{0}', space=vmem, size = 0x20000, scoped, tag = 'input window, operand 8']
    #allocation13 [shape = 'u8[2048]{0}', space=vmem, size = 0x800, scoped, tag = 'input window, operand 9']
    #allocation14 [shape = 's32[2]{0}', space=sflag, size = 0x8, scoped, tag = 'scoped memory for transformer_forward.1']
    #allocation15 [shape = 'u8[131072]{0}', space=vmem, size = 0x20000, scoped, tag = 'input window, operand 10']
    #allocation16 [shape = 'u8[1024]{0}', space=vmem, size = 0x400, scoped, tag = 'input window, operand 11']
    #allocation17 [shape = 's32[2]{0}', space=sflag, size = 0x8, scoped, tag = 'scoped memory for transformer_forward.1']
    #allocation18 [shape = 'u8[16384]{0}', space=vmem, size = 0x4000, scoped, tag = 'output window, operand 0']
    %19 = vsyncpa [#allocation5], 0
    %s20 = scalar_lea.sflag [#allocation5], 1
    %21 = vsyncpa %s20, 0
    %22 = vsyncpa [#allocation8], 0
    %s23 = scalar_lea.sflag [#allocation8], 1
    %24 = vsyncpa %s23, 0
    %25 = vsyncpa [#allocation11], 0
    %s26 = scalar_lea.sflag [#allocation11], 1
    %27 = vsyncpa %s26, 0
    %28 = vsyncpa [#allocation14], 0
    %s29 = scalar_lea.sflag [#allocation14], 1
    %30 = vsyncpa %s29, 0
    %31 = vsyncpa [#allocation17], 0
    %s32 = scalar_lea.sflag [#allocation17], 1
    %33 = vsyncpa %s32, 0
    %34 = vsyncpa [#allocation6], 0
    %s35 = scalar_lea.sflag [#allocation6], 1
    %36 = vsyncpa %s35, 0
    loop: start=0, step=1, limit=6
    $region2: #{transformer_forward.1} parent=1 // loop_pre_header
      _
    $region3: #{transformer_forward.1} parent=1 // loop_header
      %s38 = sphi 0, %s42
      %p39 = scmp.ge.s32.totalorder %s38, 6
      %s45 = sphi 0, %s57
      %s46 = sphi 0, %s53
      %s47 = sphi 0, %s45
      %s48 = sphi 0, %s46
      %s49 = sphi 0, %s47
      %s50 = sphi 0, %s48
      %s60 = sphi 0, %s62
      %s63 = sphi 0, %s60
      %s64 = sphi 0, %s63
      %s80 = sphi 0, %s64
      %s86 = sphi 0, %s88
      %s89 = sphi 0, %s86
      %s90 = sphi 0, %s89
      %s106 = sphi 0, %s90
      %s112 = sphi 0, %s114
      %s115 = sphi 0, %s112
      %s116 = sphi 0, %s115
      %s132 = sphi 0, %s116
      %s138 = sphi 0, %s140
      %s141 = sphi 0, %s138
      %s142 = sphi 0, %s141
      %s158 = sphi 0, %s142
      %s164 = sphi 0, %s166
      %s167 = sphi 0, %s164
      %s168 = sphi 0, %s167
      %s184 = sphi 0, %s168
      %s190 = sphi 0, %s192
      %s193 = sphi 0, %s190
      %s194 = sphi 0, %s193
      %s210 = sphi 0, %s194
      %s216 = sphi 0, %s218
      %s219 = sphi 0, %s216
      %s220 = sphi 0, %s219
      %s236 = sphi 0, %s220
      %s242 = sphi 0, %s244
      %s245 = sphi 0, %s242
      %s246 = sphi 0, %s245
      %s262 = sphi 0, %s246
      %s268 = sphi 0, %s270
      %s271 = sphi 0, %s268
      %s272 = sphi 0, %s271
      %s288 = sphi 0, %s272
      %s294 = sphi 0, %s296
      %s297 = sphi 0, %s294
      %s298 = sphi 0, %s297
      %s314 = sphi 0, %s298
      %s320 = sphi 0, %s322
      %s323 = sphi 0, %s320
      %s324 = sphi 0, %s323
      %s340 = sphi 0, %s324
      %s346 = sphi 0, %s348
      %s349 = sphi 0, %s346
      %s350 = sphi 0, %s349
      %s366 = sphi 0, %s350
      %s370 = sphi 0, %s370
      %s372 = sphi 0, %s370
      %s373 = sphi 0, %s372
      %s387 = sphi 0, %s373
      %s391 = sphi 0, %s391
      %s393 = sphi 0, %s391
      %s394 = sphi 0, %s393
      %s408 = sphi 0, %s394
      %s414 = sphi 0, %s416
      %s417 = sphi 0, %s414
      %s418 = sphi 0, %s417
      %s434 = sphi 0, %s418
    $region4: #{transformer_forward.1} parent=1 // loop_header_branch
      %41 = sbr.rel (%p39) target = $region8
    $region5: #{transformer_forward.1} parent=1 // loop_body
      %s43 = ssub.s32 %s38, 1
      %s44 = ssub.s32 %s38, 2
      %s51 = sadd.s32 1, %s46
      %p52 = scmp.ge.s32.totalorder %s51, 2
      %s53 = scalar_select %p52, 0, %s51
      %s54 = sadd.s32 1, %s45
      %s55 = scalar_select %p52, %s54, %s45
      %p56 = scmp.ge.s32.totalorder %s55, 2
      %s57 = scalar_select %p56, 0, %s55
      %s58 = ssub.s32 %s45, %s57
      %p59 = scmp.eq.s32.totalorder %s58, 0
      %s61 = sadd.s32 %s60, 1
      %s62 = scalar_select %p59, %s60, %s61
      %p65 = pneg %p59
      %p66 = scmp.eq.s32.totalorder %s38, 3
      %p67 = por %p65, %p66
      %p68 = scmp.ne.s32.totalorder %s60, %s63
      %p69 = scmp.eq.s32.totalorder %s38, 0
      %p70 = por %p68, %p69
      %p71 = scmp.ne.s32.totalorder %s60, %s63
      %p72 = scmp.eq.s32.totalorder %s43, 3
      %p73 = por %p71, %p72
      %p74 = scmp.ne.s32.totalorder %s63, %s64
      %p75 = scmp.eq.s32.totalorder %s43, 0
      %p76 = por %p74, %p75
      %p77 = scmp.ne.s32.totalorder %s63, %s64
      %p78 = scmp.eq.s32.totalorder %s44, 3
      %p79 = por %p77, %p78
      %p81 = scmp.ne.s32.totalorder %s64, %s80
      %p82 = scmp.eq.s32.totalorder %s44, 0
      %p83 = por %p81, %p82
      %s84 = ssub.s32 %s46, %s53
      %p85 = scmp.eq.s32.totalorder %s84, 0
      %s87 = sadd.s32 %s86, 1
      %s88 = scalar_select %p85, %s86, %s87
      %p91 = pneg %p85
      %p92 = scmp.eq.s32.totalorder %s38, 3
      %p93 = por %p91, %p92
      %p94 = scmp.ne.s32.totalorder %s86, %s89
      %p95 = scmp.eq.s32.totalorder %s38, 0
      %p96 = por %p94, %p95
      %p97 = scmp.ne.s32.totalorder %s86, %s89
      %p98 = scmp.eq.s32.totalorder %s43, 3
      %p99 = por %p97, %p98
      %p100 = scmp.ne.s32.totalorder %s89, %s90
      %p101 = scmp.eq.s32.totalorder %s43, 0
      %p102 = por %p100, %p101
      %p103 = scmp.ne.s32.totalorder %s89, %s90
      %p104 = scmp.eq.s32.totalorder %s44, 3
      %p105 = por %p103, %p104
      %p107 = scmp.ne.s32.totalorder %s90, %s106
      %p108 = scmp.eq.s32.totalorder %s44, 0
      %p109 = por %p107, %p108
      %s110 = ssub.s32 %s46, %s53
      %p111 = scmp.eq.s32.totalorder %s110, 0
      %s113 = sadd.s32 %s112, 1
      %s114 = scalar_select %p111, %s112, %s113
      %p117 = pneg %p111
      %p118 = scmp.eq.s32.totalorder %s38, 3
      %p119 = por %p117, %p118
      %p120 = scmp.ne.s32.totalorder %s112, %s115
      %p121 = scmp.eq.s32.totalorder %s38, 0
      %p122 = por %p120, %p121
      %p123 = scmp.ne.s32.totalorder %s112, %s115
      %p124 = scmp.eq.s32.totalorder %s43, 3
      %p125 = por %p123, %p124
      %p126 = scmp.ne.s32.totalorder %s115, %s116
      %p127 = scmp.eq.s32.totalorder %s43, 0
      %p128 = por %p126, %p127
      %p129 = scmp.ne.s32.totalorder %s115, %s116
      %p130 = scmp.eq.s32.totalorder %s44, 3
      %p131 = por %p129, %p130
      %p133 = scmp.ne.s32.totalorder %s116, %s132
      %p134 = scmp.eq.s32.totalorder %s44, 0
      %p135 = por %p133, %p134
      %s136 = ssub.s32 %s46, %s53
      %p137 = scmp.eq.s32.totalorder %s136, 0
      %s139 = sadd.s32 %s138, 1
      %s140 = scalar_select %p137, %s138, %s139
      %p143 = pneg %p137
      %p144 = scmp.eq.s32.totalorder %s38, 3
      %p145 = por %p143, %p144
      %p146 = scmp.ne.s32.totalorder %s138, %s141
      %p147 = scmp.eq.s32.totalorder %s38, 0
      %p148 = por %p146, %p147
      %p149 = scmp.ne.s32.totalorder %s138, %s141
      %p150 = scmp.eq.s32.totalorder %s43, 3
      %p151 = por %p149, %p150
      %p152 = scmp.ne.s32.totalorder %s141, %s142
      %p153 = scmp.eq.s32.totalorder %s43, 0
      %p154 = por %p152, %p153
      %p155 = scmp.ne.s32.totalorder %s141, %s142
      %p156 = scmp.eq.s32.totalorder %s44, 3
      %p157 = por %p155, %p156
      %p159 = scmp.ne.s32.totalorder %s142, %s158
      %p160 = scmp.eq.s32.totalorder %s44, 0
      %p161 = por %p159, %p160
      %s162 = ssub.s32 %s46, %s53
      %p163 = scmp.eq.s32.totalorder %s162, 0
      %s165 = sadd.s32 %s164, 1
      %s166 = scalar_select %p163, %s164, %s165
      %p169 = pneg %p163
      %p170 = scmp.eq.s32.totalorder %s38, 3
      %p171 = por %p169, %p170
      %p172 = scmp.ne.s32.totalorder %s164, %s167
      %p173 = scmp.eq.s32.totalorder %s38, 0
      %p174 = por %p172, %p173
      %p175 = scmp.ne.s32.totalorder %s164, %s167
      %p176 = scmp.eq.s32.totalorder %s43, 3
      %p177 = por %p175, %p176
      %p178 = scmp.ne.s32.totalorder %s167, %s168
      %p179 = scmp.eq.s32.totalorder %s43, 0
      %p180 = por %p178, %p179
      %p181 = scmp.ne.s32.totalorder %s167, %s168
      %p182 = scmp.eq.s32.totalorder %s44, 3
      %p183 = por %p181, %p182
      %p185 = scmp.ne.s32.totalorder %s168, %s184
      %p186 = scmp.eq.s32.totalorder %s44, 0
      %p187 = por %p185, %p186
      %s188 = ssub.s32 %s46, %s53
      %p189 = scmp.eq.s32.totalorder %s188, 0
      %s191 = sadd.s32 %s190, 1
      %s192 = scalar_select %p189, %s190, %s191
      %p195 = pneg %p189
      %p196 = scmp.eq.s32.totalorder %s38, 3
      %p197 = por %p195, %p196
      %p198 = scmp.ne.s32.totalorder %s190, %s193
      %p199 = scmp.eq.s32.totalorder %s38, 0
      %p200 = por %p198, %p199
      %p201 = scmp.ne.s32.totalorder %s190, %s193
      %p202 = scmp.eq.s32.totalorder %s43, 3
      %p203 = por %p201, %p202
      %p204 = scmp.ne.s32.totalorder %s193, %s194
      %p205 = scmp.eq.s32.totalorder %s43, 0
      %p206 = por %p204, %p205
      %p207 = scmp.ne.s32.totalorder %s193, %s194
      %p208 = scmp.eq.s32.totalorder %s44, 3
      %p209 = por %p207, %p208
      %p211 = scmp.ne.s32.totalorder %s194, %s210
      %p212 = scmp.eq.s32.totalorder %s44, 0
      %p213 = por %p211, %p212
      %s214 = ssub.s32 %s46, %s53
      %p215 = scmp.eq.s32.totalorder %s214, 0
      %s217 = sadd.s32 %s216, 1
      %s218 = scalar_select %p215, %s216, %s217
      %p221 = pneg %p215
      %p222 = scmp.eq.s32.totalorder %s38, 3
      %p223 = por %p221, %p222
      %p224 = scmp.ne.s32.totalorder %s216, %s219
      %p225 = scmp.eq.s32.totalorder %s38, 0
      %p226 = por %p224, %p225
      %p227 = scmp.ne.s32.totalorder %s216, %s219
      %p228 = scmp.eq.s32.totalorder %s43, 3
      %p229 = por %p227, %p228
      %p230 = scmp.ne.s32.totalorder %s219, %s220
      %p231 = scmp.eq.s32.totalorder %s43, 0
      %p232 = por %p230, %p231
      %p233 = scmp.ne.s32.totalorder %s219, %s220
      %p234 = scmp.eq.s32.totalorder %s44, 3
      %p235 = por %p233, %p234
      %p237 = scmp.ne.s32.totalorder %s220, %s236
      %p238 = scmp.eq.s32.totalorder %s44, 0
      %p239 = por %p237, %p238
      %s240 = ssub.s32 %s46, %s53
      %p241 = scmp.eq.s32.totalorder %s240, 0
      %s243 = sadd.s32 %s242, 1
      %s244 = scalar_select %p241, %s242, %s243
      %p247 = pneg %p241
      %p248 = scmp.eq.s32.totalorder %s38, 3
      %p249 = por %p247, %p248
      %p250 = scmp.ne.s32.totalorder %s242, %s245
      %p251 = scmp.eq.s32.totalorder %s38, 0
      %p252 = por %p250, %p251
      %p253 = scmp.ne.s32.totalorder %s242, %s245
      %p254 = scmp.eq.s32.totalorder %s43, 3
      %p255 = por %p253, %p254
      %p256 = scmp.ne.s32.totalorder %s245, %s246
      %p257 = scmp.eq.s32.totalorder %s43, 0
      %p258 = por %p256, %p257
      %p259 = scmp.ne.s32.totalorder %s245, %s246
      %p260 = scmp.eq.s32.totalorder %s44, 3
      %p261 = por %p259, %p260
      %p263 = scmp.ne.s32.totalorder %s246, %s262
      %p264 = scmp.eq.s32.totalorder %s44, 0
      %p265 = por %p263, %p264
      %s266 = ssub.s32 %s46, %s53
      %p267 = scmp.eq.s32.totalorder %s266, 0
      %s269 = sadd.s32 %s268, 1
      %s270 = scalar_select %p267, %s268, %s269
      %p273 = pneg %p267
      %p274 = scmp.eq.s32.totalorder %s38, 3
      %p275 = por %p273, %p274
      %p276 = scmp.ne.s32.totalorder %s268, %s271
      %p277 = scmp.eq.s32.totalorder %s38, 0
      %p278 = por %p276, %p277
      %p279 = scmp.ne.s32.totalorder %s268, %s271
      %p280 = scmp.eq.s32.totalorder %s43, 3
      %p281 = por %p279, %p280
      %p282 = scmp.ne.s32.totalorder %s271, %s272
      %p283 = scmp.eq.s32.totalorder %s43, 0
      %p284 = por %p282, %p283
      %p285 = scmp.ne.s32.totalorder %s271, %s272
      %p286 = scmp.eq.s32.totalorder %s44, 3
      %p287 = por %p285, %p286
      %p289 = scmp.ne.s32.totalorder %s272, %s288
      %p290 = scmp.eq.s32.totalorder %s44, 0
      %p291 = por %p289, %p290
      %s292 = ssub.s32 %s46, %s53
      %p293 = scmp.eq.s32.totalorder %s292, 0
      %s295 = sadd.s32 %s294, 1
      %s296 = scalar_select %p293, %s294, %s295
      %p299 = pneg %p293
      %p300 = scmp.eq.s32.totalorder %s38, 3
      %p301 = por %p299, %p300
      %p302 = scmp.ne.s32.totalorder %s294, %s297
      %p303 = scmp.eq.s32.totalorder %s38, 0
      %p304 = por %p302, %p303
      %p305 = scmp.ne.s32.totalorder %s294, %s297
      %p306 = scmp.eq.s32.totalorder %s43, 3
      %p307 = por %p305, %p306
      %p308 = scmp.ne.s32.totalorder %s297, %s298
      %p309 = scmp.eq.s32.totalorder %s43, 0
      %p310 = por %p308, %p309
      %p311 = scmp.ne.s32.totalorder %s297, %s298
      %p312 = scmp.eq.s32.totalorder %s44, 3
      %p313 = por %p311, %p312
      %p315 = scmp.ne.s32.totalorder %s298, %s314
      %p316 = scmp.eq.s32.totalorder %s44, 0
      %p317 = por %p315, %p316
      %s318 = ssub.s32 %s46, %s53
      %p319 = scmp.eq.s32.totalorder %s318, 0
      %s321 = sadd.s32 %s320, 1
      %s322 = scalar_select %p319, %s320, %s321
      %p325 = pneg %p319
      %p326 = scmp.eq.s32.totalorder %s38, 3
      %p327 = por %p325, %p326
      %p328 = scmp.ne.s32.totalorder %s320, %s323
      %p329 = scmp.eq.s32.totalorder %s38, 0
      %p330 = por %p328, %p329
      %p331 = scmp.ne.s32.totalorder %s320, %s323
      %p332 = scmp.eq.s32.totalorder %s43, 3
      %p333 = por %p331, %p332
      %p334 = scmp.ne.s32.totalorder %s323, %s324
      %p335 = scmp.eq.s32.totalorder %s43, 0
      %p336 = por %p334, %p335
      %p337 = scmp.ne.s32.totalorder %s323, %s324
      %p338 = scmp.eq.s32.totalorder %s44, 3
      %p339 = por %p337, %p338
      %p341 = scmp.ne.s32.totalorder %s324, %s340
      %p342 = scmp.eq.s32.totalorder %s44, 0
      %p343 = por %p341, %p342
      %s344 = ssub.s32 %s46, %s53
      %p345 = scmp.eq.s32.totalorder %s344, 0
      %s347 = sadd.s32 %s346, 1
      %s348 = scalar_select %p345, %s346, %s347
      %p351 = pneg %p345
      %p352 = scmp.eq.s32.totalorder %s38, 3
      %p353 = por %p351, %p352
      %p354 = scmp.ne.s32.totalorder %s346, %s349
      %p355 = scmp.eq.s32.totalorder %s38, 0
      %p356 = por %p354, %p355
      %p357 = scmp.ne.s32.totalorder %s346, %s349
      %p358 = scmp.eq.s32.totalorder %s43, 3
      %p359 = por %p357, %p358
      %p360 = scmp.ne.s32.totalorder %s349, %s350
      %p361 = scmp.eq.s32.totalorder %s43, 0
      %p362 = por %p360, %p361
      %p363 = scmp.ne.s32.totalorder %s349, %s350
      %p364 = scmp.eq.s32.totalorder %s44, 3
      %p365 = por %p363, %p364
      %p367 = scmp.ne.s32.totalorder %s350, %s366
      %p368 = scmp.eq.s32.totalorder %s44, 0
      %p369 = por %p367, %p368
      %s371 = sadd.s32 %s370, 1
      %p374 = scmp.eq.s32.totalorder %s38, 3
      %p375 = scmp.ne.s32.totalorder %s370, %s372
      %p376 = scmp.eq.s32.totalorder %s38, 0
      %p377 = por %p375, %p376
      %p378 = scmp.ne.s32.totalorder %s370, %s372
      %p379 = scmp.eq.s32.totalorder %s43, 3
      %p380 = por %p378, %p379
      %p381 = scmp.ne.s32.totalorder %s372, %s373
      %p382 = scmp.eq.s32.totalorder %s43, 0
      %p383 = por %p381, %p382
      %p384 = scmp.ne.s32.totalorder %s372, %s373
      %p385 = scmp.eq.s32.totalorder %s44, 3
      %p386 = por %p384, %p385
      %p388 = scmp.ne.s32.totalorder %s373, %s387
      %p389 = scmp.eq.s32.totalorder %s44, 0
      %p390 = por %p388, %p389
      %s392 = sadd.s32 %s391, 1
      %p395 = scmp.eq.s32.totalorder %s38, 3
      %p396 = scmp.ne.s32.totalorder %s391, %s393
      %p397 = scmp.eq.s32.totalorder %s38, 0
      %p398 = por %p396, %p397
      %p399 = scmp.ne.s32.totalorder %s391, %s393
      %p400 = scmp.eq.s32.totalorder %s43, 3
      %p401 = por %p399, %p400
      %p402 = scmp.ne.s32.totalorder %s393, %s394
      %p403 = scmp.eq.s32.totalorder %s43, 0
      %p404 = por %p402, %p403
      %p405 = scmp.ne.s32.totalorder %s393, %s394
      %p406 = scmp.eq.s32.totalorder %s44, 3
      %p407 = por %p405, %p406
      %p409 = scmp.ne.s32.totalorder %s394, %s408
      %p410 = scmp.eq.s32.totalorder %s44, 0
      %p411 = por %p409, %p410
      %s412 = ssub.s32 %s45, %s57
      %p413 = scmp.eq.s32.totalorder %s412, 0
      %s415 = sadd.s32 %s414, 1
      %s416 = scalar_select %p413, %s414, %s415
      %p419 = pneg %p413
      %p420 = scmp.eq.s32.totalorder %s38, 3
      %p421 = por %p419, %p420
      %p422 = scmp.ne.s32.totalorder %s414, %s417
      %p423 = scmp.eq.s32.totalorder %s38, 0
      %p424 = por %p422, %p423
      %p425 = scmp.ne.s32.totalorder %s414, %s417
      %p426 = scmp.eq.s32.totalorder %s43, 3
      %p427 = por %p425, %p426
      %p428 = scmp.ne.s32.totalorder %s417, %s418
      %p429 = scmp.eq.s32.totalorder %s43, 0
      %p430 = por %p428, %p429
      %p431 = scmp.ne.s32.totalorder %s417, %s418
      %p432 = scmp.eq.s32.totalorder %s44, 3
      %p433 = por %p431, %p432
      %p435 = scmp.ne.s32.totalorder %s418, %s434
      %p436 = scmp.eq.s32.totalorder %s44, 0
      %p437 = por %p435, %p436
      %p438 = scmp.le.s32.totalorder 1, %s38
      %p439 = scmp.lt.s32.totalorder %s38, 5
      %p440 = pnand %p438, %p439
      %p441 = pneg %p440
      // Predicated region
      $region9: #{transformer_forward.1} parent=5 // pred_check
        _
      $region10: #{transformer_forward.1} parent=5 // pred_check_branch
        %443 = sbr.rel (%p440) target = $region12
      $region11: #{transformer_forward.1} parent=5 // pred_region
        %s444 = ssub.s32 %s38, 1
        // Predicated region
        $region13: #{transformer_forward.1} parent=11 // pred_check
          %p445 = pneg %p383
        $region14: #{transformer_forward.1} parent=11 // pred_check_branch
          %447 = sbr.rel (%p445) target = $region16
        $region15: #{transformer_forward.1} parent=11 // pred_region
          _
        $region16: #{transformer_forward.1} parent=11 // pred_fallthru
          _
        // Predicated region
        $region17: #{transformer_forward.1} parent=11 // pred_check
          %p448 = pneg %p404
        $region18: #{transformer_forward.1} parent=11 // pred_check_branch
          %450 = sbr.rel (%p448) target = $region20
        $region19: #{transformer_forward.1} parent=11 // pred_region
          _
        $region20: #{transformer_forward.1} parent=11 // pred_fallthru
          _
      $region12: #{transformer_forward.1} parent=5 // pred_fallthru
        _
      %p451 = scmp.lt.s32.totalorder %s38, 4
      // Predicated region
      $region21: #{transformer_forward.1} parent=5 // pred_check
        %p452 = pneg %p451
      $region22: #{transformer_forward.1} parent=5 // pred_check_branch
        %454 = sbr.rel (%p452) target = $region24
      $region23: #{transformer_forward.1} parent=5 // pred_region
        // Predicated region
        $region25: #{transformer_forward.1} parent=23 // pred_check
          %p455 = pneg %p70
        $region26: #{transformer_forward.1} parent=23 // pred_check_branch
          %457 = sbr.rel (%p455) target = $region28
        $region27: #{transformer_forward.1} parent=23 // pred_region
          %s458 = sand.u32 %s60, 1
          %s459 = scalar_lea.sflag [#allocation5], %s458
          %s460 = sand.u32 %s60, 1
          %s461 = smul.addr %s460, 16
          %s462 = scalar_lea.vmem [#allocation4], %s461
          %s464 = ssub.s32 256, 256
          %465 = vsyncadd %s459, %s464
          %s466 = smul.addr %s45, 2
          %s467 = smul.addr %s466, 128
          %s468 = scalar_lea.hbm %s0, %s467
          %s469 = sshll.u32 %s462, 4
          %s470 = int_to_ptr.vmem [resolvable:$true] %s469
          %475 = dma.hbm_to_vmem [thread:$0]  %s468, 256, %s470, %s459, 128, 128, 8
        $region28: #{transformer_forward.1} parent=23 // pred_fallthru
          _
        // Predicated region
        $region29: #{transformer_forward.1} parent=23 // pred_check
          %p476 = pneg %p96
        $region30: #{transformer_forward.1} parent=23 // pred_check_branch
          %478 = sbr.rel (%p476) target = $region32
        $region31: #{transformer_forward.1} parent=23 // pred_region
          %p479 = scmp.lt.s32.totalorder %s46, 1
          %s480 = scalar_select %p479, %s46, 1
          %s481 = scalar_lea.vmem %s1, %s480
        $region32: #{transformer_forward.1} parent=23 // pred_fallthru
          _
        // Predicated region
        $region33: #{transformer_forward.1} parent=23 // pred_check
          %p482 = pneg %p122
        $region34: #{transformer_forward.1} parent=23 // pred_check_branch
          %484 = sbr.rel (%p482) target = $region36
        $region35: #{transformer_forward.1} parent=23 // pred_region
          %p485 = scmp.lt.s32.totalorder %s46, 1
          %s486 = scalar_select %p485, %s46, 1
          %s487 = scalar_lea.vmem %s2, %s486
        $region36: #{transformer_forward.1} parent=23 // pred_fallthru
          _
        // Predicated region
        $region37: #{transformer_forward.1} parent=23 // pred_check
          %p488 = pneg %p148
        $region38: #{transformer_forward.1} parent=23 // pred_check_branch
          %490 = sbr.rel (%p488) target = $region40
        $region39: #{transformer_forward.1} parent=23 // pred_region
          %s491 = sand.u32 %s38, 1
          %s492 = scalar_lea.sflag [#allocation8], %s491
          %s493 = sand.u32 %s138, 1
          %s494 = smul.addr %s493, 384
          %s495 = scalar_lea.vmem [#allocation7], %s494
          %s497 = ssub.s32 6144, 6144
          %498 = vsyncadd %s492, %s497
          %s499 = smul.addr %s46, 96
          %s500 = smul.addr %s499, 64
          %s501 = scalar_lea.hbm %s3, %s500
          %s502 = sshll.u32 %s495, 4
          %s503 = int_to_ptr.vmem [resolvable:$true] %s502
          %508 = dma.hbm_to_vmem [thread:$0]  %s501, 6144, %s503, %s492, 384, 384, 24
        $region40: #{transformer_forward.1} parent=23 // pred_fallthru
          _
        // Predicated region
        $region41: #{transformer_forward.1} parent=23 // pred_check
          %p509 = pneg %p174
        $region42: #{transformer_forward.1} parent=23 // pred_check_branch
          %511 = sbr.rel (%p509) target = $region44
        $region43: #{transformer_forward.1} parent=23 // pred_region
          %s512 = sand.u32 %s38, 1
          %s513 = scalar_lea.sflag [#allocation8], %s512
          %s514 = sand.u32 %s164, 1
          %s515 = smul.addr %s514, 128
          %s516 = scalar_lea.vmem [#allocation9], %s515
          %s518 = ssub.s32 2048, 2048
          %519 = vsyncadd %s513, %s518
          %s520 = smul.addr %s46, 32
          %s521 = smul.addr %s520, 64
          %s522 = scalar_lea.hbm %s4, %s521
          %s523 = sshll.u32 %s516, 4
          %s524 = int_to_ptr.vmem [resolvable:$true] %s523
          %529 = dma.hbm_to_vmem [thread:$0]  %s522, 2048, %s524, %s513, 64, 64, 4
        $region44: #{transformer_forward.1} parent=23 // pred_fallthru
          _
        // Predicated region
        $region45: #{transformer_forward.1} parent=23 // pred_check
          %p530 = pneg %p200
        $region46: #{transformer_forward.1} parent=23 // pred_check_branch
          %532 = sbr.rel (%p530) target = $region48
        $region47: #{transformer_forward.1} parent=23 // pred_region
          %s533 = sand.u32 %s38, 1
          %s534 = scalar_lea.sflag [#allocation11], %s533
          %s535 = sand.u32 %s190, 1
          %s536 = scalar_lea.vmem [#allocation10], %s535
          %s538 = ssub.s32 16, 16
          %539 = vsyncadd %s534, %s538
          %s540 = smul.addr %s46, 16
          %s541 = scalar_lea.hbm %s5, %s540
          %s543 = sshll.u32 %s536, 4
          %s544 = int_to_ptr.vmem [resolvable:$true] %s543
          %546 = dma.hbm_to_vmem [thread:$0]  %s541, 16, %s544, %s534
        $region48: #{transformer_forward.1} parent=23 // pred_fallthru
          _
        // Predicated region
        $region49: #{transformer_forward.1} parent=23 // pred_check
          %p547 = pneg %p226
        $region50: #{transformer_forward.1} parent=23 // pred_check_branch
          %549 = sbr.rel (%p547) target = $region52
        $region51: #{transformer_forward.1} parent=23 // pred_region
          %p550 = scmp.lt.s32.totalorder %s46, 1
          %s551 = scalar_select %p550, %s46, 1
          %s552 = scalar_lea.vmem %s6, %s551
        $region52: #{transformer_forward.1} parent=23 // pred_fallthru
          _
        // Predicated region
        $region53: #{transformer_forward.1} parent=23 // pred_check
          %p553 = pneg %p252
        $region54: #{transformer_forward.1} parent=23 // pred_check_branch
          %555 = sbr.rel (%p553) target = $region56
        $region55: #{transformer_forward.1} parent=23 // pred_region
          %p556 = scmp.lt.s32.totalorder %s46, 1
          %s557 = scalar_select %p556, %s46, 1
          %s558 = scalar_lea.vmem %s7, %s557
        $region56: #{transformer_forward.1} parent=23 // pred_fallthru
          _
        // Predicated region
        $region57: #{transformer_forward.1} parent=23 // pred_check
          %p559 = pneg %p278
        $region58: #{transformer_forward.1} parent=23 // pred_check_branch
          %561 = sbr.rel (%p559) target = $region60
        $region59: #{transformer_forward.1} parent=23 // pred_region
          %s562 = sand.u32 %s38, 1
          %s563 = scalar_lea.sflag [#allocation11], %s562
          %s564 = sand.u32 %s268, 1
          %s565 = smul.addr %s564, 128
          %s566 = scalar_lea.vmem [#allocation12], %s565
          %s568 = ssub.s32 2048, 2048
          %569 = vsyncadd %s563, %s568
          %s570 = smul.addr %s46, 32
          %s571 = smul.addr %s570, 64
          %s572 = scalar_lea.hbm %s8, %s571
          %s573 = sshll.u32 %s566, 4
          %s574 = int_to_ptr.vmem [resolvable:$true] %s573
          %579 = dma.hbm_to_vmem [thread:$0]  %s572, 2048, %s574, %s563, 128, 128, 8
        $region60: #{transformer_forward.1} parent=23 // pred_fallthru
          _
        // Predicated region
        $region61: #{transformer_forward.1} parent=23 // pred_check
          %p580 = pneg %p304
        $region62: #{transformer_forward.1} parent=23 // pred_check_branch
          %582 = sbr.rel (%p580) target = $region64
        $region63: #{transformer_forward.1} parent=23 // pred_region
          %s583 = sand.u32 %s38, 1
          %s584 = scalar_lea.sflag [#allocation14], %s583
          %s585 = sand.u32 %s294, 1
          %s586 = smul.addr %s585, 2
          %s587 = scalar_lea.vmem [#allocation13], %s586
          %s589 = ssub.s32 32, 32
          %590 = vsyncadd %s584, %s589
          %s591 = smul.addr %s46, 2
          %s592 = smul.addr %s591, 16
          %s593 = scalar_lea.hbm %s9, %s592
          %s595 = sshll.u32 %s587, 4
          %s596 = int_to_ptr.vmem [resolvable:$true] %s595
          %598 = dma.hbm_to_vmem [thread:$0]  %s593, 32, %s596, %s584
        $region64: #{transformer_forward.1} parent=23 // pred_fallthru
          _
        // Predicated region
        $region65: #{transformer_forward.1} parent=23 // pred_check
          %p599 = pneg %p330
        $region66: #{transformer_forward.1} parent=23 // pred_check_branch
          %601 = sbr.rel (%p599) target = $region68
        $region67: #{transformer_forward.1} parent=23 // pred_region
          %s602 = sand.u32 %s38, 1
          %s603 = scalar_lea.sflag [#allocation14], %s602
          %s604 = sand.u32 %s320, 1
          %s605 = smul.addr %s604, 128
          %s606 = scalar_lea.vmem [#allocation15], %s605
          %s608 = ssub.s32 2048, 2048
          %609 = vsyncadd %s603, %s608
          %s610 = smul.addr %s46, 32
          %s611 = smul.addr %s610, 64
          %s612 = scalar_lea.hbm %s10, %s611
          %s613 = sshll.u32 %s606, 4
          %s614 = int_to_ptr.vmem [resolvable:$true] %s613
          %619 = dma.hbm_to_vmem [thread:$0]  %s612, 2048, %s614, %s603, 64, 64, 4
        $region68: #{transformer_forward.1} parent=23 // pred_fallthru
          _
        // Predicated region
        $region69: #{transformer_forward.1} parent=23 // pred_check
          %p620 = pneg %p356
        $region70: #{transformer_forward.1} parent=23 // pred_check_branch
          %622 = sbr.rel (%p620) target = $region72
        $region71: #{transformer_forward.1} parent=23 // pred_region
          %s623 = sand.u32 %s346, 1
          %s624 = scalar_lea.sflag [#allocation17], %s623
          %s625 = sand.u32 %s346, 1
          %s626 = scalar_lea.vmem [#allocation16], %s625
          %s628 = ssub.s32 16, 16
          %629 = vsyncadd %s624, %s628
          %s630 = smul.addr %s46, 16
          %s631 = scalar_lea.hbm %s11, %s630
          %s633 = sshll.u32 %s626, 4
          %s634 = int_to_ptr.vmem [resolvable:$true] %s633
          %636 = dma.hbm_to_vmem [thread:$0]  %s631, 16, %s634, %s624
        $region72: #{transformer_forward.1} parent=23 // pred_fallthru
          _
      $region24: #{transformer_forward.1} parent=5 // pred_fallthru
        _
      %p637 = scmp.le.s32.totalorder 1, %s38
      %p638 = scmp.lt.s32.totalorder %s38, 5
      %p639 = pnand %p637, %p638
      %p640 = pneg %p639
      // Predicated region
      $region73: #{transformer_forward.1} parent=5 // pred_check
        _
      $region74: #{transformer_forward.1} parent=5 // pred_check_branch
        %642 = sbr.rel (%p639) target = $region76
      $region75: #{transformer_forward.1} parent=5 // pred_region
        %s643 = ssub.s32 %s38, 1
        %s644 = sand.u32 %s63, 1
        %s645 = scalar_lea.sflag [#allocation5], %s644
        %s646 = sand.u32 %s63, 1
        %s647 = smul.addr %s646, 16
        %s648 = scalar_lea.vmem [#allocation4], %s647
        // Predicated region
        $region77: #{transformer_forward.1} parent=75 // pred_check
          %p649 = pneg %p76
        $region78: #{transformer_forward.1} parent=75 // pred_check_branch
          %651 = sbr.rel (%p649) target = $region80
        $region79: #{transformer_forward.1} parent=75 // pred_region
          %652 = dma.done %s645, 256
        $region80: #{transformer_forward.1} parent=75 // pred_fallthru
          _
        %s653 = sand.u32 %s43, 1
        %s654 = scalar_lea.sflag [#allocation8], %s653
        %s655 = sand.u32 %s141, 1
        %s656 = smul.addr %s655, 384
        %s657 = scalar_lea.vmem [#allocation7], %s656
        // Predicated region
        $region81: #{transformer_forward.1} parent=75 // pred_check
          %p658 = pneg %p154
        $region82: #{transformer_forward.1} parent=75 // pred_check_branch
          %660 = sbr.rel (%p658) target = $region84
        $region83: #{transformer_forward.1} parent=75 // pred_region
          %661 = dma.done %s654, 6144
        $region84: #{transformer_forward.1} parent=75 // pred_fallthru
          _
        %s662 = sand.u32 %s43, 1
        %s663 = scalar_lea.sflag [#allocation8], %s662
        %s664 = sand.u32 %s167, 1
        %s665 = smul.addr %s664, 128
        %s666 = scalar_lea.vmem [#allocation9], %s665
        // Predicated region
        $region85: #{transformer_forward.1} parent=75 // pred_check
          %p667 = pneg %p180
        $region86: #{transformer_forward.1} parent=75 // pred_check_branch
          %669 = sbr.rel (%p667) target = $region88
        $region87: #{transformer_forward.1} parent=75 // pred_region
          %670 = dma.done %s663, 2048
        $region88: #{transformer_forward.1} parent=75 // pred_fallthru
          _
        %s671 = sand.u32 %s43, 1
        %s672 = scalar_lea.sflag [#allocation11], %s671
        %s673 = sand.u32 %s193, 1
        %s674 = scalar_lea.vmem [#allocation10], %s673
        // Predicated region
        $region89: #{transformer_forward.1} parent=75 // pred_check
          %p675 = pneg %p206
        $region90: #{transformer_forward.1} parent=75 // pred_check_branch
          %677 = sbr.rel (%p675) target = $region92
        $region91: #{transformer_forward.1} parent=75 // pred_region
          %678 = dma.done %s672, 16
        $region92: #{transformer_forward.1} parent=75 // pred_fallthru
          _
        %s679 = sand.u32 %s43, 1
        %s680 = scalar_lea.sflag [#allocation11], %s679
        %s681 = sand.u32 %s271, 1
        %s682 = smul.addr %s681, 128
        %s683 = scalar_lea.vmem [#allocation12], %s682
        // Predicated region
        $region93: #{transformer_forward.1} parent=75 // pred_check
          %p684 = pneg %p284
        $region94: #{transformer_forward.1} parent=75 // pred_check_branch
          %686 = sbr.rel (%p684) target = $region96
        $region95: #{transformer_forward.1} parent=75 // pred_region
          %687 = dma.done %s680, 2048
        $region96: #{transformer_forward.1} parent=75 // pred_fallthru
          _
        %s688 = sand.u32 %s43, 1
        %s689 = scalar_lea.sflag [#allocation14], %s688
        %s690 = sand.u32 %s297, 1
        %s691 = smul.addr %s690, 2
        %s692 = scalar_lea.vmem [#allocation13], %s691
        // Predicated region
        $region97: #{transformer_forward.1} parent=75 // pred_check
          %p693 = pneg %p310
        $region98: #{transformer_forward.1} parent=75 // pred_check_branch
          %695 = sbr.rel (%p693) target = $region100
        $region99: #{transformer_forward.1} parent=75 // pred_region
          %696 = dma.done %s689, 32
        $region100: #{transformer_forward.1} parent=75 // pred_fallthru
          _
        %s697 = sand.u32 %s43, 1
        %s698 = scalar_lea.sflag [#allocation14], %s697
        %s699 = sand.u32 %s323, 1
        %s700 = smul.addr %s699, 128
        %s701 = scalar_lea.vmem [#allocation15], %s700
        // Predicated region
        $region101: #{transformer_forward.1} parent=75 // pred_check
          %p702 = pneg %p336
        $region102: #{transformer_forward.1} parent=75 // pred_check_branch
          %704 = sbr.rel (%p702) target = $region104
        $region103: #{transformer_forward.1} parent=75 // pred_region
          %705 = dma.done %s698, 2048
        $region104: #{transformer_forward.1} parent=75 // pred_fallthru
          _
        %s706 = sand.u32 %s349, 1
        %s707 = scalar_lea.sflag [#allocation17], %s706
        %s708 = sand.u32 %s349, 1
        %s709 = scalar_lea.vmem [#allocation16], %s708
        // Predicated region
        $region105: #{transformer_forward.1} parent=75 // pred_check
          %p710 = pneg %p362
        $region106: #{transformer_forward.1} parent=75 // pred_check_branch
          %712 = sbr.rel (%p710) target = $region108
        $region107: #{transformer_forward.1} parent=75 // pred_region
          %713 = dma.done %s707, 16
        $region108: #{transformer_forward.1} parent=75 // pred_fallthru
          _
        %s714 = sand.u32 %s63, 1
        %s715 = scalar_lea.sflag [#allocation5], %s714
        %s716 = sand.u32 %s63, 1
        %s717 = smul.addr %s716, 16
        %s718 = scalar_lea.vmem [#allocation4], %s717
        %p719 = pneg %p76
        %p720 = pneg %p73
        %p721 = scmp.lt.s32.totalorder %s48, 1
        %s722 = scalar_select %p721, %s48, 1
        %s723 = scalar_lea.vmem %s1, %s722
        %p724 = pneg %p102
        %p725 = pneg %p99
        %p726 = scmp.lt.s32.totalorder %s48, 1
        %s727 = scalar_select %p726, %s48, 1
        %s728 = scalar_lea.vmem %s2, %s727
        %p729 = pneg %p128
        %p730 = pneg %p125
        %s731 = sand.u32 %s43, 1
        %s732 = scalar_lea.sflag [#allocation8], %s731
        %s733 = sand.u32 %s141, 1
        %s734 = smul.addr %s733, 384
        %s735 = scalar_lea.vmem [#allocation7], %s734
        %p736 = pneg %p154
        %p737 = pneg %p151
        %s738 = sand.u32 %s43, 1
        %s739 = scalar_lea.sflag [#allocation8], %s738
        %s740 = sand.u32 %s167, 1
        %s741 = smul.addr %s740, 128
        %s742 = scalar_lea.vmem [#allocation9], %s741
        %p743 = pneg %p180
        %p744 = pneg %p177
        %s745 = sand.u32 %s43, 1
        %s746 = scalar_lea.sflag [#allocation11], %s745
        %s747 = sand.u32 %s193, 1
        %s748 = scalar_lea.vmem [#allocation10], %s747
        %p749 = pneg %p206
        %p750 = pneg %p203
        %p751 = scmp.lt.s32.totalorder %s48, 1
        %s752 = scalar_select %p751, %s48, 1
        %s753 = scalar_lea.vmem %s6, %s752
        %p754 = pneg %p232
        %p755 = pneg %p229
        %p756 = scmp.lt.s32.totalorder %s48, 1
        %s757 = scalar_select %p756, %s48, 1
        %s758 = scalar_lea.vmem %s7, %s757
        %p759 = pneg %p258
        %p760 = pneg %p255
        %s761 = sand.u32 %s43, 1
        %s762 = scalar_lea.sflag [#allocation11], %s761
        %s763 = sand.u32 %s271, 1
        %s764 = smul.addr %s763, 128
        %s765 = scalar_lea.vmem [#allocation12], %s764
        %p766 = pneg %p284
        %p767 = pneg %p281
        %s768 = sand.u32 %s43, 1
        %s769 = scalar_lea.sflag [#allocation14], %s768
        %s770 = sand.u32 %s297, 1
        %s771 = smul.addr %s770, 2
        %s772 = scalar_lea.vmem [#allocation13], %s771
        %p773 = pneg %p310
        %p774 = pneg %p307
        %s775 = sand.u32 %s43, 1
        %s776 = scalar_lea.sflag [#allocation14], %s775
        %s777 = sand.u32 %s323, 1
        %s778 = smul.addr %s777, 128
        %s779 = scalar_lea.vmem [#allocation15], %s778
        %p780 = pneg %p336
        %p781 = pneg %p333
        %s782 = sand.u32 %s349, 1
        %s783 = scalar_lea.sflag [#allocation17], %s782
        %s784 = sand.u32 %s349, 1
        %s785 = scalar_lea.vmem [#allocation16], %s784
        %p786 = pneg %p362
        %p787 = pneg %p359
        %p788 = pneg %p383
        %p789 = pneg %p380
        %p790 = pneg %p404
        %p791 = pneg %p401
        %p792 = pneg %p430
        %p793 = pneg %p427
        %s794 = sand.u32 %s417, 1
        %s795 = scalar_lea.sflag [#allocation6], %s794
        %s796 = sand.u32 %s417, 1
        %s797 = smul.addr %s796, 16
        %s798 = scalar_lea.vmem [#allocation18], %s797
        %p799 = scmp.lt.s32.totalorder %s48, 1
        %s800 = scalar_select %p799, %s48, 1
        %s801 = scalar_lea.vmem %s1, %s800
        %p802 = scmp.lt.s32.totalorder %s48, 1
        %s803 = scalar_select %p802, %s48, 1
        %s804 = scalar_lea.vmem %s2, %s803
        %p805 = scmp.lt.s32.totalorder %s48, 1
        %s806 = scalar_select %p805, %s48, 1
        %s807 = scalar_lea.vmem %s6, %s806
        %p808 = scmp.lt.s32.totalorder %s48, 1
        %s809 = scalar_select %p808, %s48, 1
        %s810 = scalar_lea.vmem %s7, %s809
        %p812 = scmp.eq.s32.totalorder %s48, 0
        // Predicated region
        $region109: #{transformer_forward.1} parent=75 // pred_check
          %p813 = pneg %p812
        $region110: #{transformer_forward.1} parent=75 // pred_check_branch
          %815 = sbr.rel (%p813) target = $region112
        $region111: #{transformer_forward.1} parent=75 // pred_region
          %v816 = vld [vmem:[%s648] sm:$0xff]
          %v817 = vld [vmem:[%s648 + $0x8] sm:$0xff]
          %818 = vst [vmem:[#allocation2] sm:$0xff] %v816
          %819 = vst [vmem:[#allocation2 + $0x8] sm:$0xff] %v817
        $region112: #{transformer_forward.1} parent=75 // pred_fallthru
          _
        %v820 = vld [vmem:[#allocation2] sm:$0xff]
        %v821 = vld [vmem:[#allocation2 + $0x8] sm:$0xff]
        %v822 = vld [vmem:[%s801] sm:$0x1]
        %v823 = vld [vmem:[%s804] sm:$0x1]
        %824 = vadd.xlane.f32.xlu0 %v820
        %v825 = vpop.xlane.xlu0 %824
        %826 = vadd.xlane.f32.xlu0 %v821
        %v827 = vpop.xlane.xlu0 %826
        %v828 = vrcp.pop 128.0
        %v829 = vmul.f32 %v825, %v828
        %v830 = vmul.f32 %v827, %v828
        %v831 = vsub.f32 %v820, %v829
        %v832 = vsub.f32 %v821, %v830
        %v833 = vmul.f32 %v831, %v831
        %v834 = vmul.f32 %v832, %v832
        %835 = vadd.xlane.f32.xlu0 %v833
        %v836 = vpop.xlane.xlu0 %835
        %837 = vadd.xlane.f32.xlu0 %v834
        %v838 = vpop.xlane.xlu0 %837
        %v839 = vmul.f32 %v836, %v828
        %v840 = vmul.f32 %v838, %v828
        %v841 = vadd.f32 %v839, 1e-05
        %v842 = vadd.f32 %v840, 1e-05
        %v843 = vrsqrt.pop %v841
        %v844 = vrsqrt.pop %v842
        %v845 = vmul.f32 %v831, %v843
        %v846 = vmul.f32 %v832, %v844
        %v848 = vlaneseq
        %v849 = vshrl.u32 %v848, 7
        %v850 = vsub.s32 0, %v849
        %v851 = vrot.slane %v822, %v850
        %v853 = vmul.f32 %v845, %v851
        %v854 = vmul.f32 %v846, %v851
        %v856 = vlaneseq
        %v857 = vshrl.u32 %v856, 7
        %v858 = vsub.s32 0, %v857
        %v859 = vrot.slane %v823, %v858
        %v861 = vadd.f32 %v853, %v859
        %v862 = vadd.f32 %v854, %v859
        %v863 = vpack.c.bf16 %v862, %v861
        %v864 = vld [vmem:[%s657] sm:$0xff]
        %v865 = vld [vmem:[%s657 + $0x8] sm:$0xff]
        %v866 = vld [vmem:[%s657 + $0x10] sm:$0xff]
        %v867 = vld [vmem:[%s657 + $0x18] sm:$0xff]
        %v868 = vld [vmem:[%s657 + $0x20] sm:$0xff]
        %v869 = vld [vmem:[%s657 + $0x28] sm:$0xff]
        %v870 = vld [vmem:[%s657 + $0x30] sm:$0xff]
        %v871 = vld [vmem:[%s657 + $0x38] sm:$0xff]
        %v872 = vld [vmem:[%s657 + $0x40] sm:$0xff]
        %v873 = vld [vmem:[%s657 + $0x48] sm:$0xff]
        %v874 = vld [vmem:[%s657 + $0x50] sm:$0xff]
        %v875 = vld [vmem:[%s657 + $0x58] sm:$0xff]
        %v876 = vld [vmem:[%s657 + $0x60] sm:$0xff]
        %v877 = vld [vmem:[%s657 + $0x68] sm:$0xff]
        %v878 = vld [vmem:[%s657 + $0x70] sm:$0xff]
        %v879 = vld [vmem:[%s657 + $0x78] sm:$0xff]
        %v880 = vld [vmem:[%s657 + $0x80] sm:$0xff]
        %v881 = vld [vmem:[%s657 + $0x88] sm:$0xff]
        %v882 = vld [vmem:[%s657 + $0x90] sm:$0xff]
        %v883 = vld [vmem:[%s657 + $0x98] sm:$0xff]
        %v884 = vld [vmem:[%s657 + $0xa0] sm:$0xff]
        %v885 = vld [vmem:[%s657 + $0xa8] sm:$0xff]
        %v886 = vld [vmem:[%s657 + $0xb0] sm:$0xff]
        %v887 = vld [vmem:[%s657 + $0xb8] sm:$0xff]
        %v888 = vld [vmem:[%s657 + $0xc0] sm:$0xff]
        %v889 = vld [vmem:[%s657 + $0xc8] sm:$0xff]
        %v890 = vld [vmem:[%s657 + $0xd0] sm:$0xff]
        %v891 = vld [vmem:[%s657 + $0xd8] sm:$0xff]
        %v892 = vld [vmem:[%s657 + $0xe0] sm:$0xff]
        %v893 = vld [vmem:[%s657 + $0xe8] sm:$0xff]
        %v894 = vld [vmem:[%s657 + $0xf0] sm:$0xff]
        %v895 = vld [vmem:[%s657 + $0xf8] sm:$0xff]
        %v896 = vld [vmem:[%s657 + $0x100] sm:$0xff]
        %v897 = vld [vmem:[%s657 + $0x108] sm:$0xff]
        %v898 = vld [vmem:[%s657 + $0x110] sm:$0xff]
        %v899 = vld [vmem:[%s657 + $0x118] sm:$0xff]
        %v900 = vld [vmem:[%s657 + $0x120] sm:$0xff]
        %v901 = vld [vmem:[%s657 + $0x128] sm:$0xff]
        %v902 = vld [vmem:[%s657 + $0x130] sm:$0xff]
        %v903 = vld [vmem:[%s657 + $0x138] sm:$0xff]
        %v904 = vld [vmem:[%s657 + $0x140] sm:$0xff]
        %v905 = vld [vmem:[%s657 + $0x148] sm:$0xff]
        %v906 = vld [vmem:[%s657 + $0x150] sm:$0xff]
        %v907 = vld [vmem:[%s657 + $0x158] sm:$0xff]
        %v908 = vld [vmem:[%s657 + $0x160] sm:$0xff]
        %v909 = vld [vmem:[%s657 + $0x168] sm:$0xff]
        %v910 = vld [vmem:[%s657 + $0x170] sm:$0xff]
        %v911 = vld [vmem:[%s657 + $0x178] sm:$0xff]
        %v960 = vunpack.c.l.b16 %v864
        %v961 = vunpack.c.h.b16 %v864
        %v962 = vunpack.c.l.b16 %v865
        %v963 = vunpack.c.h.b16 %v865
        %v964 = vunpack.c.l.b16 %v866
        %v965 = vunpack.c.h.b16 %v866
        %v966 = vunpack.c.l.b16 %v867
        %v967 = vunpack.c.h.b16 %v867
        %v968 = vunpack.c.l.b16 %v868
        %v969 = vunpack.c.h.b16 %v868
        %v970 = vunpack.c.l.b16 %v869
        %v971 = vunpack.c.h.b16 %v869
        %v972 = vunpack.c.l.b16 %v870
        %v973 = vunpack.c.h.b16 %v870
        %v974 = vunpack.c.l.b16 %v871
        %v975 = vunpack.c.h.b16 %v871
        %v976 = vunpack.c.l.b16 %v872
        %v977 = vunpack.c.h.b16 %v872
        %v978 = vunpack.c.l.b16 %v873
        %v979 = vunpack.c.h.b16 %v873
        %v980 = vunpack.c.l.b16 %v874
        %v981 = vunpack.c.h.b16 %v874
        %v982 = vunpack.c.l.b16 %v875
        %v983 = vunpack.c.h.b16 %v875
        %v984 = vunpack.c.l.b16 %v876
        %v985 = vunpack.c.h.b16 %v876
        %v986 = vunpack.c.l.b16 %v877
        %v987 = vunpack.c.h.b16 %v877
        %v988 = vunpack.c.l.b16 %v878
        %v989 = vunpack.c.h.b16 %v878
        %v990 = vunpack.c.l.b16 %v879
        %v991 = vunpack.c.h.b16 %v879
        %v992 = vunpack.c.l.b16 %v880
        %v993 = vunpack.c.h.b16 %v880
        %v994 = vunpack.c.l.b16 %v881
        %v995 = vunpack.c.h.b16 %v881
        %v996 = vunpack.c.l.b16 %v882
        %v997 = vunpack.c.h.b16 %v882
        %v998 = vunpack.c.l.b16 %v883
        %v999 = vunpack.c.h.b16 %v883
        %v1000 = vunpack.c.l.b16 %v884
        %v1001 = vunpack.c.h.b16 %v884
        %v1002 = vunpack.c.l.b16 %v885
        %v1003 = vunpack.c.h.b16 %v885
        %v1004 = vunpack.c.l.b16 %v886
        %v1005 = vunpack.c.h.b16 %v886
        %v1006 = vunpack.c.l.b16 %v887
        %v1007 = vunpack.c.h.b16 %v887
        %v1008 = vunpack.c.l.b16 %v888
        %v1009 = vunpack.c.h.b16 %v888
        %v1010 = vunpack.c.l.b16 %v889
        %v1011 = vunpack.c.h.b16 %v889
        %v1012 = vunpack.c.l.b16 %v890
        %v1013 = vunpack.c.h.b16 %v890
        %v1014 = vunpack.c.l.b16 %v891
        %v1015 = vunpack.c.h.b16 %v891
        %v1016 = vunpack.c.l.b16 %v892
        %v1017 = vunpack.c.h.b16 %v892
        %v1018 = vunpack.c.l.b16 %v893
        %v1019 = vunpack.c.h.b16 %v893
        %v1020 = vunpack.c.l.b16 %v894
        %v1021 = vunpack.c.h.b16 %v894
        %v1022 = vunpack.c.l.b16 %v895
        %v1023 = vunpack.c.h.b16 %v895
        %v1024 = vunpack.c.l.b16 %v896
        %v1025 = vunpack.c.h.b16 %v896
        %v1026 = vunpack.c.l.b16 %v897
        %v1027 = vunpack.c.h.b16 %v897
        %v1028 = vunpack.c.l.b16 %v898
        %v1029 = vunpack.c.h.b16 %v898
        %v1030 = vunpack.c.l.b16 %v899
        %v1031 = vunpack.c.h.b16 %v899
        %v1032 = vunpack.c.l.b16 %v900
        %v1033 = vunpack.c.h.b16 %v900
        %v1034 = vunpack.c.l.b16 %v901
        %v1035 = vunpack.c.h.b16 %v901
        %v1036 = vunpack.c.l.b16 %v902
        %v1037 = vunpack.c.h.b16 %v902
        %v1038 = vunpack.c.l.b16 %v903
        %v1039 = vunpack.c.h.b16 %v903
        %v1040 = vunpack.c.l.b16 %v904
        %v1041 = vunpack.c.h.b16 %v904
        %v1042 = vunpack.c.l.b16 %v905
        %v1043 = vunpack.c.h.b16 %v905
        %v1044 = vunpack.c.l.b16 %v906
        %v1045 = vunpack.c.h.b16 %v906
        %v1046 = vunpack.c.l.b16 %v907
        %v1047 = vunpack.c.h.b16 %v907
        %v1048 = vunpack.c.l.b16 %v908
        %v1049 = vunpack.c.h.b16 %v908
        %v1050 = vunpack.c.l.b16 %v909
        %v1051 = vunpack.c.h.b16 %v909
        %v1052 = vunpack.c.l.b16 %v910
        %v1053 = vunpack.c.h.b16 %v910
        %v1054 = vunpack.c.l.b16 %v911
        %v1055 = vunpack.c.h.b16 %v911
        %v1056 = vpack.c.b16 %v966, %v960
        %v1057 = vpack.c.b16 %v967, %v961
        %v1058 = vpack.c.b16 %v968, %v962
        %v1059 = vpack.c.b16 %v969, %v963
        %v1060 = vpack.c.b16 %v970, %v964
        %v1061 = vpack.c.b16 %v971, %v965
        %v1062 = vpack.c.b16 %v978, %v972
        %v1063 = vpack.c.b16 %v979, %v973
        %v1064 = vpack.c.b16 %v980, %v974
        %v1065 = vpack.c.b16 %v981, %v975
        %v1066 = vpack.c.b16 %v982, %v976
        %v1067 = vpack.c.b16 %v983, %v977
        %v1068 = vpack.c.b16 %v990, %v984
        %v1069 = vpack.c.b16 %v991, %v985
        %v1070 = vpack.c.b16 %v992, %v986
        %v1071 = vpack.c.b16 %v993, %v987
        %v1072 = vpack.c.b16 %v994, %v988
        %v1073 = vpack.c.b16 %v995, %v989
        %v1074 = vpack.c.b16 %v1002, %v996
        %v1075 = vpack.c.b16 %v1003, %v997
        %v1076 = vpack.c.b16 %v1004, %v998
        %v1077 = vpack.c.b16 %v1005, %v999
        %v1078 = vpack.c.b16 %v1006, %v1000
        %v1079 = vpack.c.b16 %v1007, %v1001
        %v1080 = vpack.c.b16 %v1014, %v1008
        %v1081 = vpack.c.b16 %v1015, %v1009
        %v1082 = vpack.c.b16 %v1016, %v1010
        %v1083 = vpack.c.b16 %v1017, %v1011
        %v1084 = vpack.c.b16 %v1018, %v1012
        %v1085 = vpack.c.b16 %v1019, %v1013
        %v1086 = vpack.c.b16 %v1026, %v1020
        %v1087 = vpack.c.b16 %v1027, %v1021
        %v1088 = vpack.c.b16 %v1028, %v1022
        %v1089 = vpack.c.b16 %v1029, %v1023
        %v1090 = vpack.c.b16 %v1030, %v1024
        %v1091 = vpack.c.b16 %v1031, %v1025
        %v1092 = vpack.c.b16 %v1038, %v1032
        %v1093 = vpack.c.b16 %v1039, %v1033
        %v1094 = vpack.c.b16 %v1040, %v1034
        %v1095 = vpack.c.b16 %v1041, %v1035
        %v1096 = vpack.c.b16 %v1042, %v1036
        %v1097 = vpack.c.b16 %v1043, %v1037
        %v1098 = vpack.c.b16 %v1050, %v1044
        %v1099 = vpack.c.b16 %v1051, %v1045
        %v1100 = vpack.c.b16 %v1052, %v1046
        %v1101 = vpack.c.b16 %v1053, %v1047
        %v1102 = vpack.c.b16 %v1054, %v1048
        %v1103 = vpack.c.b16 %v1055, %v1049
        %1152 = vmatprep.subr.bf16.mxu0 %v1099
        %1153 = vmatpush1.bf16.msra.mxu0 %v1098
        %1154 = vmatprep.subr.bf16.mxu0 %v1093
        %1155 = vmatpush1.bf16.msra.mxu0 %v1092
        %1156 = vmatprep.subr.bf16.mxu0 %v1087
        %1157 = vmatpush1.bf16.msra.mxu0 %v1086
        %1158 = vmatprep.subr.bf16.mxu0 %v1081
        %1159 = vmatpush1.bf16.msra.mxu0 %v1080
        %1160 = vmatprep.subr.bf16.mxu0 %v1075
        %1161 = vmatpush1.bf16.msra.mxu0 %v1074
        %1162 = vmatprep.subr.bf16.mxu0 %v1069
        %1163 = vmatpush1.bf16.msra.mxu0 %v1068
        %1164 = vmatprep.subr.bf16.mxu0 %v1063
        %1165 = vmatpush1.bf16.msra.mxu0 %v1062
        %1166 = vmatprep.subr.bf16.mxu0 %v1057
        %1167 = vmatpush1.bf16.msra.mxu0 %v1056
        %1168 = vmatprep.subr.bf16.mxu0 0
        %1169 = vmatpush2.bf16.msra.mxu0 0
        %1170 = vmatprep.subr.bf16.mxu0 0
        %1171 = vmatpush2.bf16.msra.mxu0 0
        %1172 = vmatprep.subr.bf16.mxu0 0
        %1173 = vmatpush2.bf16.msra.mxu0 0
        %1174 = vmatprep.subr.bf16.mxu0 0
        %1175 = vmatpush2.bf16.msra.mxu0 0
        %1176 = vmatprep.subr.bf16.mxu0 0
        %1177 = vmatpush2.bf16.msra.mxu0 0
        %1178 = vmatprep.subr.bf16.mxu0 0
        %1179 = vmatpush2.bf16.msra.mxu0 0
        %1180 = vmatprep.subr.bf16.mxu0 0
        %1181 = vmatpush2.bf16.msra.mxu0 0
        %1182 = vmatprep.subr.bf16.mxu0 0
        %1183 = vmatpush2.bf16.msra.mxu0 0
        %1184 = vmatprep.mubr.bf16.mxu0 0
        %1185 = vmatmul.mubr.bf16.gmra.mxu0 %v863
        %v1186 = vpop.f32.mrf.mxu0
        %v1187 = vadd.f32 0.0, %v1186
        %v1188 = vpop.f32.mrf.mxu0
        %v1189 = vadd.f32 0.0, %v1188
        %v1190 = vpop.f32.mrf.mxu0
        %v1191 = vadd.f32 0.0, %v1190
        %v1192 = vpop.f32.mrf.mxu0
        %v1193 = vadd.f32 0.0, %v1192
        %1194 = vdwg.mxu0
        %1195 = vmatprep.subr.bf16.mxu0 %v1101
        %1196 = vmatpush1.bf16.msra.mxu0 %v1100
        %1197 = vmatprep.subr.bf16.mxu0 %v1095
        %1198 = vmatpush1.bf16.msra.mxu0 %v1094
        %1199 = vmatprep.subr.bf16.mxu0 %v1089
        %1200 = vmatpush1.bf16.msra.mxu0 %v1088
        %1201 = vmatprep.subr.bf16.mxu0 %v1083
        %1202 = vmatpush1.bf16.msra.mxu0 %v1082
        %1203 = vmatprep.subr.bf16.mxu0 %v1077
        %1204 = vmatpush1.bf16.msra.mxu0 %v1076
        %1205 = vmatprep.subr.bf16.mxu0 %v1071
        %1206 = vmatpush1.bf16.msra.mxu0 %v1070
        %1207 = vmatprep.subr.bf16.mxu0 %v1065
        %1208 = vmatpush1.bf16.msra.mxu0 %v1064
        %1209 = vmatprep.subr.bf16.mxu0 %v1059
        %1210 = vmatpush1.bf16.msra.mxu0 %v1058
        %1211 = vmatprep.subr.bf16.mxu0 0
        %1212 = vmatpush2.bf16.msra.mxu0 0
        %1213 = vmatprep.subr.bf16.mxu0 0
        %1214 = vmatpush2.bf16.msra.mxu0 0
        %1215 = vmatprep.subr.bf16.mxu0 0
        %1216 = vmatpush2.bf16.msra.mxu0 0
        %1217 = vmatprep.subr.bf16.mxu0 0
        %1218 = vmatpush2.bf16.msra.mxu0 0
        %1219 = vmatprep.subr.bf16.mxu0 0
        %1220 = vmatpush2.bf16.msra.mxu0 0
        %1221 = vmatprep.subr.bf16.mxu0 0
        %1222 = vmatpush2.bf16.msra.mxu0 0
        %1223 = vmatprep.subr.bf16.mxu0 0
        %1224 = vmatpush2.bf16.msra.mxu0 0
        %1225 = vmatprep.subr.bf16.mxu0 0
        %1226 = vmatpush2.bf16.msra.mxu0 0
        %1227 = vmatprep.mubr.bf16.mxu0 0
        %1228 = vmatmul.mubr.bf16.gmra.mxu0 %v863
        %v1229 = vpop.f32.mrf.mxu0
        %v1230 = vadd.f32 0.0, %v1229
        %v1231 = vpop.f32.mrf.mxu0
        %v1232 = vadd.f32 0.0, %v1231
        %v1233 = vpop.f32.mrf.mxu0
        %v1234 = vadd.f32 0.0, %v1233
        %v1235 = vpop.f32.mrf.mxu0
        %v1236 = vadd.f32 0.0, %v1235
        %1237 = vdwg.mxu0
        %1238 = vmatprep.subr.bf16.mxu0 %v1103
        %1239 = vmatpush1.bf16.msra.mxu0 %v1102
        %1240 = vmatprep.subr.bf16.mxu0 %v1097
        %1241 = vmatpush1.bf16.msra.mxu0 %v1096
        %1242 = vmatprep.subr.bf16.mxu0 %v1091
        %1243 = vmatpush1.bf16.msra.mxu0 %v1090
        %1244 = vmatprep.subr.bf16.mxu0 %v1085
        %1245 = vmatpush1.bf16.msra.mxu0 %v1084
        %1246 = vmatprep.subr.bf16.mxu0 %v1079
        %1247 = vmatpush1.bf16.msra.mxu0 %v1078
        %1248 = vmatprep.subr.bf16.mxu0 %v1073
        %1249 = vmatpush1.bf16.msra.mxu0 %v1072
        %1250 = vmatprep.subr.bf16.mxu0 %v1067
        %1251 = vmatpush1.bf16.msra.mxu0 %v1066
        %1252 = vmatprep.subr.bf16.mxu0 %v1061
        %1253 = vmatpush1.bf16.msra.mxu0 %v1060
        %1254 = vmatprep.subr.bf16.mxu0 0
        %1255 = vmatpush2.bf16.msra.mxu0 0
        %1256 = vmatprep.subr.bf16.mxu0 0
        %1257 = vmatpush2.bf16.msra.mxu0 0
        %1258 = vmatprep.subr.bf16.mxu0 0
        %1259 = vmatpush2.bf16.msra.mxu0 0
        %1260 = vmatprep.subr.bf16.mxu0 0
        %1261 = vmatpush2.bf16.msra.mxu0 0
        %1262 = vmatprep.subr.bf16.mxu0 0
        %1263 = vmatpush2.bf16.msra.mxu0 0
        %1264 = vmatprep.subr.bf16.mxu0 0
        %1265 = vmatpush2.bf16.msra.mxu0 0
        %1266 = vmatprep.subr.bf16.mxu0 0
        %1267 = vmatpush2.bf16.msra.mxu0 0
        %1268 = vmatprep.subr.bf16.mxu0 0
        %1269 = vmatpush2.bf16.msra.mxu0 0
        %1270 = vmatprep.mubr.bf16.mxu0 0
        %1271 = vmatmul.mubr.bf16.gmra.mxu0 %v863
        %v1272 = vpop.f32.mrf.mxu0
        %v1273 = vadd.f32 0.0, %v1272
        %v1274 = vpop.f32.mrf.mxu0
        %v1275 = vadd.f32 0.0, %v1274
        %v1276 = vpop.f32.mrf.mxu0
        %v1277 = vadd.f32 0.0, %v1276
        %v1278 = vpop.f32.mrf.mxu0
        %v1279 = vadd.f32 0.0, %v1278
        %1280 = vdwg.mxu0
        %v1281 = vpack.c.bf16 %v1191, %v1187
        %v1282 = vpack.c.bf16 %v1193, %v1189
        %v1283 = vpack.c.bf16 %v1234, %v1230
        %v1284 = vpack.c.bf16 %v1236, %v1232
        %v1285 = vpack.c.bf16 %v1277, %v1273
        %v1286 = vpack.c.bf16 %v1279, %v1275
        %1287 = vmatprep.subr.bf16.mxu0 0
        %1288 = vmatpush1.bf16.xpose.msra.mxu0 0
        %1289 = vmatprep.subr.bf16.mxu0 0
        %1290 = vmatpush1.bf16.xpose.msra.mxu0 0
        %1291 = vmatprep.subr.bf16.mxu0 0
        %1292 = vmatpush1.bf16.xpose.msra.mxu0 0
        %1293 = vmatprep.subr.bf16.mxu0 0
        %1294 = vmatpush1.bf16.xpose.msra.mxu0 0
        %1295 = vmatprep.subr.bf16.mxu0 0
        %1296 = vmatpush1.bf16.xpose.msra.mxu0 0
        %1297 = vmatprep.subr.bf16.mxu0 0
        %1298 = vmatpush1.bf16.xpose.msra.mxu0 0
        %1299 = vmatprep.subr.bf16.mxu0 0
        %1300 = vmatpush1.bf16.xpose.msra.mxu0 0
        %1301 = vmatprep.subr.bf16.mxu0 0
        %1302 = vmatpush1.bf16.xpose.msra.mxu0 %v1283
        %1303 = vmatprep.subr.bf16.mxu0 0
        %1304 = vmatpush2.bf16.xpose.msra.mxu0 0
        %1305 = vmatprep.subr.bf16.mxu0 0
        %1306 = vmatpush2.bf16.xpose.msra.mxu0 0
        %1307 = vmatprep.subr.bf16.mxu0 0
        %1308 = vmatpush2.bf16.xpose.msra.mxu0 0
        %1309 = vmatprep.subr.bf16.mxu0 0
        %1310 = vmatpush2.bf16.xpose.msra.mxu0 0
        %1311 = vmatprep.subr.bf16.mxu0 0
        %1312 = vmatpush2.bf16.xpose.msra.mxu0 0
        %1313 = vmatprep.subr.bf16.mxu0 0
        %1314 = vmatpush2.bf16.xpose.msra.mxu0 0
        %1315 = vmatprep.subr.bf16.mxu0 0
        %1316 = vmatpush2.bf16.xpose.msra.mxu0 0
        %1317 = vmatprep.subr.bf16.mxu0 0
        %1318 = vmatpush2.bf16.xpose.msra.mxu0 0
        %1319 = vmatprep.mubr.bf16.mxu0 0
        %1320 = vmatmul.mubr.bf16.gmra.mxu0 %v1281
        %v1321 = vpop.f32.mrf.mxu0
        %v1322 = vadd.f32 0.0, %v1321
        %v1323 = vpop.f32.mrf.mxu0
        %v1324 = vpop.f32.mrf.mxu0
        %v1325 = vadd.f32 0.0, %v1324
        %v1326 = vpop.f32.mrf.mxu0
        %1327 = vdwg.mxu0
        %1328 = vmatprep.subr.bf16.mxu0 0
        %1329 = vmatpush1.bf16.xpose.msra.mxu0 0
        %1330 = vmatprep.subr.bf16.mxu0 0
        %1331 = vmatpush1.bf16.xpose.msra.mxu0 0
        %1332 = vmatprep.subr.bf16.mxu0 0
        %1333 = vmatpush1.bf16.xpose.msra.mxu0 0
        %1334 = vmatprep.subr.bf16.mxu0 0
        %1335 = vmatpush1.bf16.xpose.msra.mxu0 0
        %1336 = vmatprep.subr.bf16.mxu0 0
        %1337 = vmatpush1.bf16.xpose.msra.mxu0 0
        %1338 = vmatprep.subr.bf16.mxu0 0
        %1339 = vmatpush1.bf16.xpose.msra.mxu0 0
        %1340 = vmatprep.subr.bf16.mxu0 0
        %1341 = vmatpush1.bf16.xpose.msra.mxu0 0
        %1342 = vmatprep.subr.bf16.mxu0 0
        %1343 = vmatpush1.bf16.xpose.msra.mxu0 %v1284
        %1344 = vmatprep.subr.bf16.mxu0 0
        %1345 = vmatpush2.bf16.xpose.msra.mxu0 0
        %1346 = vmatprep.subr.bf16.mxu0 0
        %1347 = vmatpush2.bf16.xpose.msra.mxu0 0
        %1348 = vmatprep.subr.bf16.mxu0 0
        %1349 = vmatpush2.bf16.xpose.msra.mxu0 0
        %1350 = vmatprep.subr.bf16.mxu0 0
        %1351 = vmatpush2.bf16.xpose.msra.mxu0 0
        %1352 = vmatprep.subr.bf16.mxu0 0
        %1353 = vmatpush2.bf16.xpose.msra.mxu0 0
        %1354 = vmatprep.subr.bf16.mxu0 0
        %1355 = vmatpush2.bf16.xpose.msra.mxu0 0
        %1356 = vmatprep.subr.bf16.mxu0 0
        %1357 = vmatpush2.bf16.xpose.msra.mxu0 0
        %1358 = vmatprep.subr.bf16.mxu0 0
        %1359 = vmatpush2.bf16.xpose.msra.mxu0 0
        %1360 = vmatprep.mubr.bf16.mxu0 0
        %1361 = vmatmul.mubr.bf16.gmra.mxu0 %v1282
        %v1362 = vpop.f32.mrf.mxu0
        %v1363 = vadd.f32 0.0, %v1362
        %v1364 = vpop.f32.mrf.mxu0
        %v1365 = vpop.f32.mrf.mxu0
        %v1366 = vadd.f32 0.0, %v1365
        %v1367 = vpop.f32.mrf.mxu0
        %1368 = vdwg.mxu0
        %v1369 = vmul.f32 %v1322, 0.088388346
        %v1370 = vmul.f32 %v1325, 0.088388346
        %v1371 = vmul.f32 %v1363, 0.088388346
        %v1372 = vmul.f32 %v1366, 0.088388346
        %vm1373 = vcmask 130048
        %v1374 = vsel %vm1373, %v1369, -inf
        %1375 = vmax.xlane.f32.xlu0 %v1374
        %v1376 = vpop.xlane.xlu0 %1375
        %v1377 = vsel %vm1373, %v1370, -inf
        %1378 = vmax.xlane.f32.xlu0 %v1377
        %v1379 = vpop.xlane.xlu0 %1378
        %v1380 = vsel %vm1373, %v1371, -inf
        %1381 = vmax.xlane.f32.xlu0 %v1380
        %v1382 = vpop.xlane.xlu0 %1381
        %v1383 = vsel %vm1373, %v1372, -inf
        %1384 = vmax.xlane.f32.xlu0 %v1383
        %v1385 = vpop.xlane.xlu0 %1384
        %v1386 = vsub.f32 %v1369, %v1376
        %v1387 = vsub.f32 %v1370, %v1379
        %v1388 = vsub.f32 %v1371, %v1382
        %v1389 = vsub.f32 %v1372, %v1385
        %v1390 = vmul.f32 %v1386, 1.442695
        %v1391 = vpow.pop %v1390
        %v1392 = vmul.f32 %v1387, 1.442695
        %v1393 = vpow.pop %v1392
        %v1394 = vmul.f32 %v1388, 1.442695
        %v1395 = vpow.pop %v1394
        %v1396 = vmul.f32 %v1389, 1.442695
        %v1397 = vpow.pop %v1396
        %v1398 = vsel %vm1373, %v1391, 0.0
        %1399 = vadd.xlane.f32.xlu0 %v1398
        %v1400 = vpop.xlane.xlu0 %1399
        %v1401 = vsel %vm1373, %v1393, 0.0
        %1402 = vadd.xlane.f32.xlu0 %v1401
        %v1403 = vpop.xlane.xlu0 %1402
        %v1404 = vsel %vm1373, %v1395, 0.0
        %1405 = vadd.xlane.f32.xlu0 %v1404
        %v1406 = vpop.xlane.xlu0 %1405
        %v1407 = vsel %vm1373, %v1397, 0.0
        %1408 = vadd.xlane.f32.xlu0 %v1407
        %v1409 = vpop.xlane.xlu0 %1408
        %v1410 = vrcp.pop %v1400
        %v1411 = vrcp.pop %v1403
        %v1412 = vrcp.pop %v1406
        %v1413 = vrcp.pop %v1409
        %v1414 = vmul.f32 %v1391, %v1410
        %v1415 = vmul.f32 %v1393, %v1411
        %v1416 = vmul.f32 %v1395, %v1412
        %v1417 = vmul.f32 %v1397, %v1413
        %v1418 = vpack.c.bf16 %v1415, %v1414
        %v1419 = vpack.c.bf16 %v1417, %v1416
        %v1421 = vsel %vm1373, %v1418, 0
        %1423 = vmatprep.subr.bf16.mxu0 0
        %1424 = vmatpush1.bf16.msra.mxu0 0
        %1425 = vmatprep.subr.bf16.mxu0 0
        %1426 = vmatpush1.bf16.msra.mxu0 0
        %1427 = vmatprep.subr.bf16.mxu0 0
        %1428 = vmatpush1.bf16.msra.mxu0 0
        %1429 = vmatprep.subr.bf16.mxu0 0
        %1430 = vmatpush1.bf16.msra.mxu0 0
        %1431 = vmatprep.subr.bf16.mxu0 0
        %1432 = vmatpush1.bf16.msra.mxu0 0
        %1433 = vmatprep.subr.bf16.mxu0 0
        %1434 = vmatpush1.bf16.msra.mxu0 0
        %1435 = vmatprep.subr.bf16.mxu0 0
        %1436 = vmatpush1.bf16.msra.mxu0 0
        %1437 = vmatprep.subr.bf16.mxu0 0
        %1438 = vmatpush1.bf16.msra.mxu0 %v1285
        %1439 = vmatprep.subr.bf16.mxu0 0
        %1440 = vmatpush2.bf16.msra.mxu0 0
        %1441 = vmatprep.subr.bf16.mxu0 0
        %1442 = vmatpush2.bf16.msra.mxu0 0
        %1443 = vmatprep.subr.bf16.mxu0 0
        %1444 = vmatpush2.bf16.msra.mxu0 0
        %1445 = vmatprep.subr.bf16.mxu0 0
        %1446 = vmatpush2.bf16.msra.mxu0 0
        %1447 = vmatprep.subr.bf16.mxu0 0
        %1448 = vmatpush2.bf16.msra.mxu0 0
        %1449 = vmatprep.subr.bf16.mxu0 0
        %1450 = vmatpush2.bf16.msra.mxu0 0
        %1451 = vmatprep.subr.bf16.mxu0 0
        %1452 = vmatpush2.bf16.msra.mxu0 0
        %1453 = vmatprep.subr.bf16.mxu0 0
        %1454 = vmatpush2.bf16.msra.mxu0 0
        %1455 = vmatprep.mubr.bf16.mxu0 0
        %1456 = vmatmul.mubr.bf16.gmra.mxu0 %v1421
        %v1457 = vpop.f32.mrf.mxu0
        %v1458 = vadd.f32 0.0, %v1457
        %v1459 = vpop.f32.mrf.mxu0
        %v1460 = vpop.f32.mrf.mxu0
        %v1461 = vadd.f32 0.0, %v1460
        %v1462 = vpop.f32.mrf.mxu0
        %1463 = vdwg.mxu0
        %v1465 = vsel %vm1373, %v1419, 0
        %1467 = vmatprep.subr.bf16.mxu0 0
        %1468 = vmatpush1.bf16.msra.mxu0 0
        %1469 = vmatprep.subr.bf16.mxu0 0
        %1470 = vmatpush1.bf16.msra.mxu0 0
        %1471 = vmatprep.subr.bf16.mxu0 0
        %1472 = vmatpush1.bf16.msra.mxu0 0
        %1473 = vmatprep.subr.bf16.mxu0 0
        %1474 = vmatpush1.bf16.msra.mxu0 0
        %1475 = vmatprep.subr.bf16.mxu0 0
        %1476 = vmatpush1.bf16.msra.mxu0 0
        %1477 = vmatprep.subr.bf16.mxu0 0
        %1478 = vmatpush1.bf16.msra.mxu0 0
        %1479 = vmatprep.subr.bf16.mxu0 0
        %1480 = vmatpush1.bf16.msra.mxu0 0
        %1481 = vmatprep.subr.bf16.mxu0 0
        %1482 = vmatpush1.bf16.msra.mxu0 %v1286
        %1483 = vmatprep.subr.bf16.mxu0 0
        %1484 = vmatpush2.bf16.msra.mxu0 0
        %1485 = vmatprep.subr.bf16.mxu0 0
        %1486 = vmatpush2.bf16.msra.mxu0 0
        %1487 = vmatprep.subr.bf16.mxu0 0
        %1488 = vmatpush2.bf16.msra.mxu0 0
        %1489 = vmatprep.subr.bf16.mxu0 0
        %1490 = vmatpush2.bf16.msra.mxu0 0
        %1491 = vmatprep.subr.bf16.mxu0 0
        %1492 = vmatpush2.bf16.msra.mxu0 0
        %1493 = vmatprep.subr.bf16.mxu0 0
        %1494 = vmatpush2.bf16.msra.mxu0 0
        %1495 = vmatprep.subr.bf16.mxu0 0
        %1496 = vmatpush2.bf16.msra.mxu0 0
        %1497 = vmatprep.subr.bf16.mxu0 0
        %1498 = vmatpush2.bf16.msra.mxu0 0
        %1499 = vmatprep.mubr.bf16.mxu0 0
        %1500 = vmatmul.mubr.bf16.gmra.mxu0 %v1465
        %v1501 = vpop.f32.mrf.mxu0
        %v1502 = vadd.f32 0.0, %v1501
        %v1503 = vpop.f32.mrf.mxu0
        %v1504 = vpop.f32.mrf.mxu0
        %v1505 = vadd.f32 0.0, %v1504
        %v1506 = vpop.f32.mrf.mxu0
        %1507 = vdwg.mxu0
        %v1508 = vpack.c.bf16 %v1461, %v1458
        %v1510 = vunpack.c.l.b16 %v1508
        %v1511 = vunpack.c.h.b16 %v1508
        %v1512 = vpack.c.b16 %v1510, %v1510
        %v1513 = vpack.c.b16 %v1511, %v1511
        %1516 = vst [vmem:[#allocation3] sm:$0xf] %v1512
        %1517 = vst [vmem:[#allocation3 + $0x8] sm:$0xf] %v1513
        %v1518 = vpack.c.bf16 %v1505, %v1502
        %v1520 = vunpack.c.l.b16 %v1518
        %v1521 = vunpack.c.h.b16 %v1518
        %v1522 = vpack.c.b16 %v1520, %v1520
        %v1523 = vpack.c.b16 %v1521, %v1521
        %1526 = vst [vmem:[#allocation3 + $0x4] sm:$0xf] %v1522
        %1527 = vst [vmem:[#allocation3 + $0xc] sm:$0xf] %v1523
        %v1528 = vld [vmem:[#allocation3] sm:$0xff]
        %v1529 = vld [vmem:[#allocation3 + $0x8] sm:$0xff]
        %v1530 = vld [vmem:[%s666] sm:$0xf]
        %v1531 = vld [vmem:[%s666 + $0x4] sm:$0xf]
        %v1532 = vld [vmem:[%s666 + $0x8] sm:$0xf]
        %v1533 = vld [vmem:[%s666 + $0xc] sm:$0xf]
        %v1534 = vld [vmem:[%s666 + $0x10] sm:$0xf]
        %v1535 = vld [vmem:[%s666 + $0x14] sm:$0xf]
        %v1536 = vld [vmem:[%s666 + $0x18] sm:$0xf]
        %v1537 = vld [vmem:[%s666 + $0x1c] sm:$0xf]
        %v1538 = vld [vmem:[%s666 + $0x20] sm:$0xf]
        %v1539 = vld [vmem:[%s666 + $0x24] sm:$0xf]
        %v1540 = vld [vmem:[%s666 + $0x28] sm:$0xf]
        %v1541 = vld [vmem:[%s666 + $0x2c] sm:$0xf]
        %v1542 = vld [vmem:[%s666 + $0x30] sm:$0xf]
        %v1543 = vld [vmem:[%s666 + $0x34] sm:$0xf]
        %v1544 = vld [vmem:[%s666 + $0x38] sm:$0xf]
        %v1545 = vld [vmem:[%s666 + $0x3c] sm:$0xf]
        %v1546 = vld [vmem:[%s666 + $0x40] sm:$0xf]
        %v1547 = vld [vmem:[%s666 + $0x44] sm:$0xf]
        %v1548 = vld [vmem:[%s666 + $0x48] sm:$0xf]
        %v1549 = vld [vmem:[%s666 + $0x4c] sm:$0xf]
        %v1550 = vld [vmem:[%s666 + $0x50] sm:$0xf]
        %v1551 = vld [vmem:[%s666 + $0x54] sm:$0xf]
        %v1552 = vld [vmem:[%s666 + $0x58] sm:$0xf]
        %v1553 = vld [vmem:[%s666 + $0x5c] sm:$0xf]
        %v1554 = vld [vmem:[%s666 + $0x60] sm:$0xf]
        %v1555 = vld [vmem:[%s666 + $0x64] sm:$0xf]
        %v1556 = vld [vmem:[%s666 + $0x68] sm:$0xf]
        %v1557 = vld [vmem:[%s666 + $0x6c] sm:$0xf]
        %v1558 = vld [vmem:[%s666 + $0x70] sm:$0xf]
        %v1559 = vld [vmem:[%s666 + $0x74] sm:$0xf]
        %v1560 = vld [vmem:[%s666 + $0x78] sm:$0xf]
        %v1561 = vld [vmem:[%s666 + $0x7c] sm:$0xf]
        %v1562 = vld [vmem:[%s674] sm:$0x1]
        %v1564 = vlaneseq
        %v1565 = vshrl.u32 %v1564, 7
        %v1566 = vsub.s32 0, %v1565
        %v1567 = vrot.slane %v1562, %v1566
        %v1571 = vunpack.c.l.b16 %v1528
        %v1572 = vunpack.c.h.b16 %v1528
        %v1573 = vunpack.c.l.b16 %v1529
        %v1574 = vunpack.c.h.b16 %v1529
        %v1575 = vpack.c.b16 %v1573, %v1571
        %v1576 = vpack.c.b16 %v1574, %v1572
        %v1611 = vunpack.c.l.b16 %v1530
        %v1612 = vunpack.c.l.b16 %v1531
        %v1613 = vunpack.c.l.b16 %v1532
        %v1614 = vunpack.c.l.b16 %v1533
        %v1615 = vunpack.c.l.b16 %v1534
        %v1616 = vunpack.c.l.b16 %v1535
        %v1617 = vunpack.c.l.b16 %v1536
        %v1618 = vunpack.c.l.b16 %v1537
        %v1619 = vunpack.c.l.b16 %v1538
        %v1620 = vunpack.c.l.b16 %v1539
        %v1621 = vunpack.c.l.b16 %v1540
        %v1622 = vunpack.c.l.b16 %v1541
        %v1623 = vunpack.c.l.b16 %v1542
        %v1624 = vunpack.c.l.b16 %v1543
        %v1625 = vunpack.c.l.b16 %v1544
        %v1626 = vunpack.c.l.b16 %v1545
        %v1627 = vunpack.c.l.b16 %v1546
        %v1628 = vunpack.c.l.b16 %v1547
        %v1629 = vunpack.c.l.b16 %v1548
        %v1630 = vunpack.c.l.b16 %v1549
        %v1631 = vunpack.c.l.b16 %v1550
        %v1632 = vunpack.c.l.b16 %v1551
        %v1633 = vunpack.c.l.b16 %v1552
        %v1634 = vunpack.c.l.b16 %v1553
        %v1635 = vunpack.c.l.b16 %v1554
        %v1636 = vunpack.c.l.b16 %v1555
        %v1637 = vunpack.c.l.b16 %v1556
        %v1638 = vunpack.c.l.b16 %v1557
        %v1639 = vunpack.c.l.b16 %v1558
        %v1640 = vunpack.c.l.b16 %v1559
        %v1641 = vunpack.c.l.b16 %v1560
        %v1642 = vunpack.c.l.b16 %v1561
        %v1643 = vpack.c.b16 %v1612, %v1611
        %v1644 = vpack.c.b16 %v1614, %v1613
        %v1645 = vpack.c.b16 %v1616, %v1615
        %v1646 = vpack.c.b16 %v1618, %v1617
        %v1647 = vpack.c.b16 %v1620, %v1619
        %v1648 = vpack.c.b16 %v1622, %v1621
        %v1649 = vpack.c.b16 %v1624, %v1623
        %v1650 = vpack.c.b16 %v1626, %v1625
        %v1651 = vpack.c.b16 %v1628, %v1627
        %v1652 = vpack.c.b16 %v1630, %v1629
        %v1653 = vpack.c.b16 %v1632, %v1631
        %v1654 = vpack.c.b16 %v1634, %v1633
        %v1655 = vpack.c.b16 %v1636, %v1635
        %v1656 = vpack.c.b16 %v1638, %v1637
        %v1657 = vpack.c.b16 %v1640, %v1639
        %v1658 = vpack.c.b16 %v1642, %v1641
        %1675 = vmatprep.subr.bf16.mxu0 0
        %1676 = vmatpush1.bf16.msra.mxu0 %v1650
        %1677 = vmatprep.subr.bf16.mxu0 0
        %1678 = vmatpush1.bf16.msra.mxu0 %v1649
        %1679 = vmatprep.subr.bf16.mxu0 0
        %1680 = vmatpush1.bf16.msra.mxu0 %v1648
        %1681 = vmatprep.subr.bf16.mxu0 0
        %1682 = vmatpush1.bf16.msra.mxu0 %v1647
        %1683 = vmatprep.subr.bf16.mxu0 0
        %1684 = vmatpush1.bf16.msra.mxu0 %v1646
        %1685 = vmatprep.subr.bf16.mxu0 0
        %1686 = vmatpush1.bf16.msra.mxu0 %v1645
        %1687 = vmatprep.subr.bf16.mxu0 0
        %1688 = vmatpush1.bf16.msra.mxu0 %v1644
        %1689 = vmatprep.subr.bf16.mxu0 0
        %1690 = vmatpush1.bf16.msra.mxu0 %v1643
        %1691 = vmatprep.subr.bf16.mxu0 0
        %1692 = vmatpush2.bf16.msra.mxu0 %v1658
        %1693 = vmatprep.subr.bf16.mxu0 0
        %1694 = vmatpush2.bf16.msra.mxu0 %v1657
        %1695 = vmatprep.subr.bf16.mxu0 0
        %1696 = vmatpush2.bf16.msra.mxu0 %v1656
        %1697 = vmatprep.subr.bf16.mxu0 0
        %1698 = vmatpush2.bf16.msra.mxu0 %v1655
        %1699 = vmatprep.subr.bf16.mxu0 0
        %1700 = vmatpush2.bf16.msra.mxu0 %v1654
        %1701 = vmatprep.subr.bf16.mxu0 0
        %1702 = vmatpush2.bf16.msra.mxu0 %v1653
        %1703 = vmatprep.subr.bf16.mxu0 0
        %1704 = vmatpush2.bf16.msra.mxu0 %v1652
        %1705 = vmatprep.subr.bf16.mxu0 0
        %1706 = vmatpush2.bf16.msra.mxu0 %v1651
        %1707 = vmatprep.mubr.bf16.mxu0 %v1576
        %1708 = vmatmul.mubr.bf16.gmra.mxu0 %v1575
        %v1709 = vpop.f32.mrf.mxu0
        %v1710 = vadd.f32 %v1567, %v1709
        %v1711 = vpop.f32.mrf.mxu0
        %v1712 = vpop.f32.mrf.mxu0
        %v1713 = vadd.f32 %v1567, %v1712
        %v1714 = vpop.f32.mrf.mxu0
        %1715 = vdwg.mxu0
        %v1716 = vadd.f32 %v820, %v1710
        %v1717 = vadd.f32 %v821, %v1713
        %v1718 = vld [vmem:[%s807] sm:$0x1]
        %v1719 = vld [vmem:[%s810] sm:$0x1]
        %1720 = vadd.xlane.f32.xlu0 %v1716
        %v1721 = vpop.xlane.xlu0 %1720
        %1722 = vadd.xlane.f32.xlu0 %v1717
        %v1723 = vpop.xlane.xlu0 %1722
        %v1724 = vmul.f32 %v1721, %v828
        %v1725 = vmul.f32 %v1723, %v828
        %v1726 = vsub.f32 %v1716, %v1724
        %v1727 = vsub.f32 %v1717, %v1725
        %v1728 = vmul.f32 %v1726, %v1726
        %v1729 = vmul.f32 %v1727, %v1727
        %1730 = vadd.xlane.f32.xlu0 %v1728
        %v1731 = vpop.xlane.xlu0 %1730
        %1732 = vadd.xlane.f32.xlu0 %v1729
        %v1733 = vpop.xlane.xlu0 %1732
        %v1734 = vmul.f32 %v1731, %v828
        %v1735 = vmul.f32 %v1733, %v828
        %v1736 = vadd.f32 %v1734, 1e-05
        %v1737 = vadd.f32 %v1735, 1e-05
        %v1738 = vrsqrt.pop %v1736
        %v1739 = vrsqrt.pop %v1737
        %v1740 = vmul.f32 %v1726, %v1738
        %v1741 = vmul.f32 %v1727, %v1739
        %v1743 = vlaneseq
        %v1744 = vshrl.u32 %v1743, 7
        %v1745 = vsub.s32 0, %v1744
        %v1746 = vrot.slane %v1718, %v1745
        %v1748 = vmul.f32 %v1740, %v1746
        %v1749 = vmul.f32 %v1741, %v1746
        %v1751 = vlaneseq
        %v1752 = vshrl.u32 %v1751, 7
        %v1753 = vsub.s32 0, %v1752
        %v1754 = vrot.slane %v1719, %v1753
        %v1756 = vadd.f32 %v1748, %v1754
        %v1757 = vadd.f32 %v1749, %v1754
        %v1758 = vpack.c.bf16 %v1757, %v1756
        %v1759 = vld [vmem:[%s683] sm:$0xff]
        %v1760 = vld [vmem:[%s683 + $0x8] sm:$0xff]
        %v1761 = vld [vmem:[%s683 + $0x10] sm:$0xff]
        %v1762 = vld [vmem:[%s683 + $0x18] sm:$0xff]
        %v1763 = vld [vmem:[%s683 + $0x20] sm:$0xff]
        %v1764 = vld [vmem:[%s683 + $0x28] sm:$0xff]
        %v1765 = vld [vmem:[%s683 + $0x30] sm:$0xff]
        %v1766 = vld [vmem:[%s683 + $0x38] sm:$0xff]
        %v1767 = vld [vmem:[%s683 + $0x40] sm:$0xff]
        %v1768 = vld [vmem:[%s683 + $0x48] sm:$0xff]
        %v1769 = vld [vmem:[%s683 + $0x50] sm:$0xff]
        %v1770 = vld [vmem:[%s683 + $0x58] sm:$0xff]
        %v1771 = vld [vmem:[%s683 + $0x60] sm:$0xff]
        %v1772 = vld [vmem:[%s683 + $0x68] sm:$0xff]
        %v1773 = vld [vmem:[%s683 + $0x70] sm:$0xff]
        %v1774 = vld [vmem:[%s683 + $0x78] sm:$0xff]
        %v1775 = vld [vmem:[%s692] sm:$0x3]
        %v1777 = vlaneseq
        %v1778 = vshrl.u32 %v1777, 7
        %v1779 = vsub.s32 0, %v1778
        %v1780 = vrot.slane %v1775, %v1779
        %v1781 = vlaneseq
        %v1782 = vshrl.u32 %v1781, 7
        %v1783 = vsub.s32 1, %v1782
        %v1784 = vrot.slane %v1775, %v1783
        %v1803 = vunpack.c.l.b16 %v1759
        %v1804 = vunpack.c.h.b16 %v1759
        %v1805 = vunpack.c.l.b16 %v1760
        %v1806 = vunpack.c.h.b16 %v1760
        %v1807 = vunpack.c.l.b16 %v1761
        %v1808 = vunpack.c.h.b16 %v1761
        %v1809 = vunpack.c.l.b16 %v1762
        %v1810 = vunpack.c.h.b16 %v1762
        %v1811 = vunpack.c.l.b16 %v1763
        %v1812 = vunpack.c.h.b16 %v1763
        %v1813 = vunpack.c.l.b16 %v1764
        %v1814 = vunpack.c.h.b16 %v1764
        %v1815 = vunpack.c.l.b16 %v1765
        %v1816 = vunpack.c.h.b16 %v1765
        %v1817 = vunpack.c.l.b16 %v1766
        %v1818 = vunpack.c.h.b16 %v1766
        %v1819 = vunpack.c.l.b16 %v1767
        %v1820 = vunpack.c.h.b16 %v1767
        %v1821 = vunpack.c.l.b16 %v1768
        %v1822 = vunpack.c.h.b16 %v1768
        %v1823 = vunpack.c.l.b16 %v1769
        %v1824 = vunpack.c.h.b16 %v1769
        %v1825 = vunpack.c.l.b16 %v1770
        %v1826 = vunpack.c.h.b16 %v1770
        %v1827 = vunpack.c.l.b16 %v1771
        %v1828 = vunpack.c.h.b16 %v1771
        %v1829 = vunpack.c.l.b16 %v1772
        %v1830 = vunpack.c.h.b16 %v1772
        %v1831 = vunpack.c.l.b16 %v1773
        %v1832 = vunpack.c.h.b16 %v1773
        %v1833 = vunpack.c.l.b16 %v1774
        %v1834 = vunpack.c.h.b16 %v1774
        %v1835 = vpack.c.b16 %v1805, %v1803
        %v1836 = vpack.c.b16 %v1806, %v1804
        %v1837 = vpack.c.b16 %v1809, %v1807
        %v1838 = vpack.c.b16 %v1810, %v1808
        %v1839 = vpack.c.b16 %v1813, %v1811
        %v1840 = vpack.c.b16 %v1814, %v1812
        %v1841 = vpack.c.b16 %v1817, %v1815
        %v1842 = vpack.c.b16 %v1818, %v1816
        %v1843 = vpack.c.b16 %v1821, %v1819
        %v1844 = vpack.c.b16 %v1822, %v1820
        %v1845 = vpack.c.b16 %v1825, %v1823
        %v1846 = vpack.c.b16 %v1826, %v1824
        %v1847 = vpack.c.b16 %v1829, %v1827
        %v1848 = vpack.c.b16 %v1830, %v1828
        %v1849 = vpack.c.b16 %v1833, %v1831
        %v1850 = vpack.c.b16 %v1834, %v1832
        %1867 = vmatprep.subr.bf16.mxu0 %v1850
        %1868 = vmatpush1.bf16.msra.mxu0 %v1849
        %1869 = vmatprep.subr.bf16.mxu0 %v1848
        %1870 = vmatpush1.bf16.msra.mxu0 %v1847
        %1871 = vmatprep.subr.bf16.mxu0 %v1846
        %1872 = vmatpush1.bf16.msra.mxu0 %v1845
        %1873 = vmatprep.subr.bf16.mxu0 %v1844
        %1874 = vmatpush1.bf16.msra.mxu0 %v1843
        %1875 = vmatprep.subr.bf16.mxu0 %v1842
        %1876 = vmatpush1.bf16.msra.mxu0 %v1841
        %1877 = vmatprep.subr.bf16.mxu0 %v1840
        %1878 = vmatpush1.bf16.msra.mxu0 %v1839
        %1879 = vmatprep.subr.bf16.mxu0 %v1838
        %1880 = vmatpush1.bf16.msra.mxu0 %v1837
        %1881 = vmatprep.subr.bf16.mxu0 %v1836
        %1882 = vmatpush1.bf16.msra.mxu0 %v1835
        %1883 = vmatprep.subr.bf16.mxu0 0
        %1884 = vmatpush2.bf16.msra.mxu0 0
        %1885 = vmatprep.subr.bf16.mxu0 0
        %1886 = vmatpush2.bf16.msra.mxu0 0
        %1887 = vmatprep.subr.bf16.mxu0 0
        %1888 = vmatpush2.bf16.msra.mxu0 0
        %1889 = vmatprep.subr.bf16.mxu0 0
        %1890 = vmatpush2.bf16.msra.mxu0 0
        %1891 = vmatprep.subr.bf16.mxu0 0
        %1892 = vmatpush2.bf16.msra.mxu0 0
        %1893 = vmatprep.subr.bf16.mxu0 0
        %1894 = vmatpush2.bf16.msra.mxu0 0
        %1895 = vmatprep.subr.bf16.mxu0 0
        %1896 = vmatpush2.bf16.msra.mxu0 0
        %1897 = vmatprep.subr.bf16.mxu0 0
        %1898 = vmatpush2.bf16.msra.mxu0 0
        %1899 = vmatprep.mubr.bf16.mxu0 0
        %1900 = vmatmul.mubr.bf16.gmra.mxu0 %v1758
        %v1901 = vpop.f32.mrf.mxu0
        %v1902 = vadd.f32 %v1780, %v1901
        %v1903 = vpop.f32.mrf.mxu0
        %v1904 = vadd.f32 %v1784, %v1903
        %v1905 = vpop.f32.mrf.mxu0
        %v1906 = vadd.f32 %v1780, %v1905
        %v1907 = vpop.f32.mrf.mxu0
        %v1908 = vadd.f32 %v1784, %v1907
        %1909 = vdwg.mxu0
        %v1910 = vmul.f32 %v1902, 0.5
        %v1911 = vmul.f32 %v1904, 0.5
        %v1912 = vmul.f32 %v1906, 0.5
        %v1913 = vmul.f32 %v1908, 0.5
        %v1914 = vmul.f32 %v1902, 0.70710677
        %v1915 = vmul.f32 %v1904, 0.70710677
        %v1916 = vmul.f32 %v1906, 0.70710677
        %v1917 = vmul.f32 %v1908, 0.70710677
        %v1918 = verf.f32.pop %v1914
        %v1919 = verf.f32.pop %v1915
        %v1920 = verf.f32.pop %v1916
        %v1921 = verf.f32.pop %v1917
        %v1922 = vadd.f32 %v1918, 1.0
        %v1923 = vadd.f32 %v1919, 1.0
        %v1924 = vadd.f32 %v1920, 1.0
        %v1925 = vadd.f32 %v1921, 1.0
        %v1926 = vmul.f32 %v1910, %v1922
        %v1927 = vmul.f32 %v1911, %v1923
        %v1928 = vmul.f32 %v1912, %v1924
        %v1929 = vmul.f32 %v1913, %v1925
        %v1930 = vpack.c.bf16 %v1928, %v1926
        %v1931 = vpack.c.bf16 %v1929, %v1927
        %v1932 = vld [vmem:[%s701] sm:$0xf]
        %v1933 = vld [vmem:[%s701 + $0x4] sm:$0xf]
        %v1934 = vld [vmem:[%s701 + $0x8] sm:$0xf]
        %v1935 = vld [vmem:[%s701 + $0xc] sm:$0xf]
        %v1936 = vld [vmem:[%s701 + $0x10] sm:$0xf]
        %v1937 = vld [vmem:[%s701 + $0x14] sm:$0xf]
        %v1938 = vld [vmem:[%s701 + $0x18] sm:$0xf]
        %v1939 = vld [vmem:[%s701 + $0x1c] sm:$0xf]
        %v1940 = vld [vmem:[%s701 + $0x20] sm:$0xf]
        %v1941 = vld [vmem:[%s701 + $0x24] sm:$0xf]
        %v1942 = vld [vmem:[%s701 + $0x28] sm:$0xf]
        %v1943 = vld [vmem:[%s701 + $0x2c] sm:$0xf]
        %v1944 = vld [vmem:[%s701 + $0x30] sm:$0xf]
        %v1945 = vld [vmem:[%s701 + $0x34] sm:$0xf]
        %v1946 = vld [vmem:[%s701 + $0x38] sm:$0xf]
        %v1947 = vld [vmem:[%s701 + $0x3c] sm:$0xf]
        %v1948 = vld [vmem:[%s701 + $0x40] sm:$0xf]
        %v1949 = vld [vmem:[%s701 + $0x44] sm:$0xf]
        %v1950 = vld [vmem:[%s701 + $0x48] sm:$0xf]
        %v1951 = vld [vmem:[%s701 + $0x4c] sm:$0xf]
        %v1952 = vld [vmem:[%s701 + $0x50] sm:$0xf]
        %v1953 = vld [vmem:[%s701 + $0x54] sm:$0xf]
        %v1954 = vld [vmem:[%s701 + $0x58] sm:$0xf]
        %v1955 = vld [vmem:[%s701 + $0x5c] sm:$0xf]
        %v1956 = vld [vmem:[%s701 + $0x60] sm:$0xf]
        %v1957 = vld [vmem:[%s701 + $0x64] sm:$0xf]
        %v1958 = vld [vmem:[%s701 + $0x68] sm:$0xf]
        %v1959 = vld [vmem:[%s701 + $0x6c] sm:$0xf]
        %v1960 = vld [vmem:[%s701 + $0x70] sm:$0xf]
        %v1961 = vld [vmem:[%s701 + $0x74] sm:$0xf]
        %v1962 = vld [vmem:[%s701 + $0x78] sm:$0xf]
        %v1963 = vld [vmem:[%s701 + $0x7c] sm:$0xf]
        %v1964 = vld [vmem:[%s709] sm:$0x1]
        %v1966 = vlaneseq
        %v1967 = vshrl.u32 %v1966, 7
        %v1968 = vsub.s32 0, %v1967
        %v1969 = vrot.slane %v1964, %v1968
        %v2003 = vunpack.c.l.b16 %v1932
        %v2004 = vunpack.c.l.b16 %v1933
        %v2005 = vunpack.c.l.b16 %v1934
        %v2006 = vunpack.c.l.b16 %v1935
        %v2007 = vunpack.c.l.b16 %v1936
        %v2008 = vunpack.c.l.b16 %v1937
        %v2009 = vunpack.c.l.b16 %v1938
        %v2010 = vunpack.c.l.b16 %v1939
        %v2011 = vunpack.c.l.b16 %v1940
        %v2012 = vunpack.c.l.b16 %v1941
        %v2013 = vunpack.c.l.b16 %v1942
        %v2014 = vunpack.c.l.b16 %v1943
        %v2015 = vunpack.c.l.b16 %v1944
        %v2016 = vunpack.c.l.b16 %v1945
        %v2017 = vunpack.c.l.b16 %v1946
        %v2018 = vunpack.c.l.b16 %v1947
        %v2019 = vunpack.c.l.b16 %v1948
        %v2020 = vunpack.c.l.b16 %v1949
        %v2021 = vunpack.c.l.b16 %v1950
        %v2022 = vunpack.c.l.b16 %v1951
        %v2023 = vunpack.c.l.b16 %v1952
        %v2024 = vunpack.c.l.b16 %v1953
        %v2025 = vunpack.c.l.b16 %v1954
        %v2026 = vunpack.c.l.b16 %v1955
        %v2027 = vunpack.c.l.b16 %v1956
        %v2028 = vunpack.c.l.b16 %v1957
        %v2029 = vunpack.c.l.b16 %v1958
        %v2030 = vunpack.c.l.b16 %v1959
        %v2031 = vunpack.c.l.b16 %v1960
        %v2032 = vunpack.c.l.b16 %v1961
        %v2033 = vunpack.c.l.b16 %v1962
        %v2034 = vunpack.c.l.b16 %v1963
        %v2035 = vpack.c.b16 %v2004, %v2003
        %v2036 = vpack.c.b16 %v2006, %v2005
        %v2037 = vpack.c.b16 %v2008, %v2007
        %v2038 = vpack.c.b16 %v2010, %v2009
        %v2039 = vpack.c.b16 %v2012, %v2011
        %v2040 = vpack.c.b16 %v2014, %v2013
        %v2041 = vpack.c.b16 %v2016, %v2015
        %v2042 = vpack.c.b16 %v2018, %v2017
        %v2043 = vpack.c.b16 %v2020, %v2019
        %v2044 = vpack.c.b16 %v2022, %v2021
        %v2045 = vpack.c.b16 %v2024, %v2023
        %v2046 = vpack.c.b16 %v2026, %v2025
        %v2047 = vpack.c.b16 %v2028, %v2027
        %v2048 = vpack.c.b16 %v2030, %v2029
        %v2049 = vpack.c.b16 %v2032, %v2031
        %v2050 = vpack.c.b16 %v2034, %v2033
        %2067 = vmatprep.subr.bf16.mxu0 0
        %2068 = vmatpush1.bf16.msra.mxu0 %v2042
        %2069 = vmatprep.subr.bf16.mxu0 0
        %2070 = vmatpush1.bf16.msra.mxu0 %v2041
        %2071 = vmatprep.subr.bf16.mxu0 0
        %2072 = vmatpush1.bf16.msra.mxu0 %v2040
        %2073 = vmatprep.subr.bf16.mxu0 0
        %2074 = vmatpush1.bf16.msra.mxu0 %v2039
        %2075 = vmatprep.subr.bf16.mxu0 0
        %2076 = vmatpush1.bf16.msra.mxu0 %v2038
        %2077 = vmatprep.subr.bf16.mxu0 0
        %2078 = vmatpush1.bf16.msra.mxu0 %v2037
        %2079 = vmatprep.subr.bf16.mxu0 0
        %2080 = vmatpush1.bf16.msra.mxu0 %v2036
        %2081 = vmatprep.subr.bf16.mxu0 0
        %2082 = vmatpush1.bf16.msra.mxu0 %v2035
        %2083 = vmatprep.subr.bf16.mxu0 0
        %2084 = vmatpush2.bf16.msra.mxu0 %v2050
        %2085 = vmatprep.subr.bf16.mxu0 0
        %2086 = vmatpush2.bf16.msra.mxu0 %v2049
        %2087 = vmatprep.subr.bf16.mxu0 0
        %2088 = vmatpush2.bf16.msra.mxu0 %v2048
        %2089 = vmatprep.subr.bf16.mxu0 0
        %2090 = vmatpush2.bf16.msra.mxu0 %v2047
        %2091 = vmatprep.subr.bf16.mxu0 0
        %2092 = vmatpush2.bf16.msra.mxu0 %v2046
        %2093 = vmatprep.subr.bf16.mxu0 0
        %2094 = vmatpush2.bf16.msra.mxu0 %v2045
        %2095 = vmatprep.subr.bf16.mxu0 0
        %2096 = vmatpush2.bf16.msra.mxu0 %v2044
        %2097 = vmatprep.subr.bf16.mxu0 0
        %2098 = vmatpush2.bf16.msra.mxu0 %v2043
        %2099 = vmatprep.mubr.bf16.mxu0 %v1931
        %2100 = vmatmul.mubr.bf16.gmra.mxu0 %v1930
        %v2101 = vpop.f32.mrf.mxu0
        %v2102 = vadd.f32 %v1969, %v2101
        %v2103 = vpop.f32.mrf.mxu0
        %v2104 = vpop.f32.mrf.mxu0
        %v2105 = vadd.f32 %v1969, %v2104
        %v2106 = vpop.f32.mrf.mxu0
        %2107 = vdwg.mxu0
        %v2108 = vadd.f32 %v1716, %v2102
        %v2109 = vadd.f32 %v1717, %v2105
        %2110 = vst [vmem:[#allocation2] sm:$0xff] %v2108
        %2111 = vst [vmem:[#allocation2 + $0x8] sm:$0xff] %v2109
        %p2112 = scmp.eq.s32.totalorder %s48, 1
        // Predicated region
        $region113: #{transformer_forward.1} parent=75 // pred_check
          %p2113 = pneg %p2112
        $region114: #{transformer_forward.1} parent=75 // pred_check_branch
          %2115 = sbr.rel (%p2113) target = $region116
        $region115: #{transformer_forward.1} parent=75 // pred_region
          %v2116 = vld [vmem:[%s12] sm:$0x1]
          %v2117 = vld [vmem:[%s13] sm:$0x1]
          %2118 = vadd.xlane.f32.xlu0 %v2108
          %v2119 = vpop.xlane.xlu0 %2118
          %2120 = vadd.xlane.f32.xlu0 %v2109
          %v2121 = vpop.xlane.xlu0 %2120
          %v2122 = vmul.f32 %v2119, %v828
          %v2123 = vmul.f32 %v2121, %v828
          %v2124 = vsub.f32 %v2108, %v2122
          %v2125 = vsub.f32 %v2109, %v2123
          %v2126 = vmul.f32 %v2124, %v2124
          %v2127 = vmul.f32 %v2125, %v2125
          %2128 = vadd.xlane.f32.xlu0 %v2126
          %v2129 = vpop.xlane.xlu0 %2128
          %2130 = vadd.xlane.f32.xlu0 %v2127
          %v2131 = vpop.xlane.xlu0 %2130
          %v2132 = vmul.f32 %v2129, %v828
          %v2133 = vmul.f32 %v2131, %v828
          %v2134 = vadd.f32 %v2132, 1e-05
          %v2135 = vadd.f32 %v2133, 1e-05
          %v2136 = vrsqrt.pop %v2134
          %v2137 = vrsqrt.pop %v2135
          %v2138 = vmul.f32 %v2124, %v2136
          %v2139 = vmul.f32 %v2125, %v2137
          %v2141 = vlaneseq
          %v2142 = vshrl.u32 %v2141, 7
          %v2143 = vsub.s32 0, %v2142
          %v2144 = vrot.slane %v2116, %v2143
          %v2146 = vmul.f32 %v2138, %v2144
          %v2147 = vmul.f32 %v2139, %v2144
          %v2149 = vlaneseq
          %v2150 = vshrl.u32 %v2149, 7
          %v2151 = vsub.s32 0, %v2150
          %v2152 = vrot.slane %v2117, %v2151
          %v2154 = vadd.f32 %v2146, %v2152
          %v2155 = vadd.f32 %v2147, %v2152
          %2156 = vst [vmem:[%s798] sm:$0xff] %v2154
          %2157 = vst [vmem:[%s798 + $0x8] sm:$0xff] %v2155
        $region116: #{transformer_forward.1} parent=75 // pred_fallthru
          _
        %s2158 = sand.u32 %s417, 1
        %s2159 = scalar_lea.sflag [#allocation6], %s2158
        %s2160 = sand.u32 %s417, 1
        %s2161 = smul.addr %s2160, 16
        %s2162 = scalar_lea.vmem [#allocation18], %s2161
        // Predicated region
        $region117: #{transformer_forward.1} parent=75 // pred_check
          %p2163 = pneg %p427
        $region118: #{transformer_forward.1} parent=75 // pred_check_branch
          %2165 = sbr.rel (%p2163) target = $region120
        $region119: #{transformer_forward.1} parent=75 // pred_region
          %s2167 = ssub.s32 256, 256
          %2168 = vsyncadd %s2159, %s2167
          %s2169 = smul.addr %s47, 2
          %s2170 = smul.addr %s2169, 128
          %s2171 = scalar_lea.hbm %s14, %s2170
          %s2172 = sshll.u32 %s2162, 4
          %s2173 = int_to_ptr.vmem [resolvable:$true] %s2172
          %2178 = dma.vmem_to_hbm [thread:$0]  %s2173, 256, %s2171, %s2159, 128, 128, 8
        $region120: #{transformer_forward.1} parent=75 // pred_fallthru
          _
      $region76: #{transformer_forward.1} parent=5 // pred_fallthru
        _
      %p2179 = scmp.le.s32.totalorder 2, %s38
      // Predicated region
      $region121: #{transformer_forward.1} parent=5 // pred_check
        %p2180 = pneg %p2179
      $region122: #{transformer_forward.1} parent=5 // pred_check_branch
        %2182 = sbr.rel (%p2180) target = $region124
      $region123: #{transformer_forward.1} parent=5 // pred_region
        %s2183 = ssub.s32 %s38, 2
        // Predicated region
        $region125: #{transformer_forward.1} parent=123 // pred_check
          %p2184 = pneg %p433
        $region126: #{transformer_forward.1} parent=123 // pred_check_branch
          %2186 = sbr.rel (%p2184) target = $region128
        $region127: #{transformer_forward.1} parent=123 // pred_region
          %s2187 = sand.u32 %s418, 1
          %s2188 = scalar_lea.sflag [#allocation6], %s2187
          %s2189 = sand.u32 %s418, 1
          %s2190 = smul.addr %s2189, 16
          %s2191 = scalar_lea.vmem [#allocation18], %s2190
          %2192 = dma.done %s2188, 256
        $region128: #{transformer_forward.1} parent=123 // pred_fallthru
          _
      $region124: #{transformer_forward.1} parent=5 // pred_fallthru
        _
    $region6: #{transformer_forward.1} parent=1 // loop_footer
      %s42 = sadd.s32 1, %s38
    $region7: #{transformer_forward.1} parent=1 // loop_footer_branch
      %37 = sbr.rel target = $region3
    $region8: #{transformer_forward.1} parent=1 // loop_exit
      _
    %2193 = vsyncpa [#allocation5], 1
    %s2194 = scalar_lea.sflag [#allocation5], 1
    %2195 = vsyncpa %s2194, 1
    %2196 = vsyncpa [#allocation8], 1
    %s2197 = scalar_lea.sflag [#allocation8], 1
    %2198 = vsyncpa %s2197, 1
    %2199 = vsyncpa [#allocation11], 1
    %s2200 = scalar_lea.sflag [#allocation11], 1
    %2201 = vsyncpa %s2200, 1
    %2202 = vsyncpa [#allocation14], 1
    %s2203 = scalar_lea.sflag [#allocation14], 1
    %2204 = vsyncpa %s2203, 1
    %2205 = vsyncpa [#allocation17], 1
    %s2206 = scalar_lea.sflag [#allocation17], 1
    %2207 = vsyncpa %s2206, 1
    %2208 = vsyncpa [#allocation6], 1
    %s2209 = scalar_lea.sflag [#allocation6], 1
    %2210 = vsyncpa %s2209, 1

</llo_original>
